<compile_context>
chip_gen: v5e
topology: v5e:2x2
jax: 0.10.0
libtpu: 0.0.40
codegen_flags: <defaults>
</compile_context>

<pallas_src>
import numpy as np
import jax
import jax.numpy as jnp
from jax.experimental import pallas as pl
from jax.experimental.pallas import tpu as pltpu

N_NODES = 23            # keypoints referenced by create_edges() are 11..22
N_PAD = 24              # node axis padded to a sublane-friendly size
HIDDEN1 = 64
HIDDEN2 = 128
LANE = 128
BN_EPS = 1e-5
NEG_BIG = -1e30
GRAPHS_PER_BLOCK = 16   # G: graphs fused per matmul group (G*N_PAD = 384 rows)
CHUNK_MAX = 4           # up to CHUNK G-groups fused per grid step


def create_edges():
    # (src, dst) pairs, exactly as in the PyTorch module
    return [(11, 13), (13, 15), (15, 17), (17, 19), (15, 21), (15, 19),
            (12, 14), (14, 16), (16, 18), (18, 20), (20, 16), (16, 22),
            (11, 12)]


def normalized_adjacency(num_nodes=N_NODES):
    """PyG gcn_norm: A_hat = D^-1/2 (A + I) D^-1/2, messages flow src->dst."""
    A = np.zeros((num_nodes, num_nodes), dtype=np.float32)
    for s, d in create_edges():
        A[d, s] = 1.0                       # A_hat[dst, src]
    A += np.eye(num_nodes, dtype=np.float32)
    deg = A.sum(axis=1)
    dinv = 1.0 / np.sqrt(deg)
    return (dinv[:, None] * A * dinv[None, :]).astype(np.float32)


def build_graph_constants(g=GRAPHS_PER_BLOCK):
    """Block-diagonal aggregation / pooling operators (bf16 MXU operands)."""
    a23 = normalized_adjacency()
    a_pad = np.zeros((N_PAD, N_PAD), dtype=np.float32)
    a_pad[:N_NODES, :N_NODES] = a23
    # I_G (x) A_hat : one wide MXU matmul aggregates all G graphs at once.
    a_big = np.kron(np.eye(g, dtype=np.float32), a_pad).astype(np.float32)
    # r = mean over the 23 real rows of A_hat -> fuses conv3 with mean-pool.
    r = np.zeros((N_PAD,), dtype=np.float32)
    r[:N_NODES] = a23.mean(axis=0)
    r_big = np.kron(np.eye(g, dtype=np.float32), r[None, :]).astype(np.float32)
    return (jnp.asarray(a_big).astype(jnp.bfloat16),
            jnp.asarray(r_big).astype(jnp.bfloat16))


def fold_params(raw, num_classes):
    """Fold eval-mode BatchNorm into conv1/conv2; pad conv3 to 128 lanes.

    w2/w3 are stored in bf16 (MXU operands); w1 (VPU path) and biases stay f32.
    """
    f32, bf16 = jnp.float32, jnp.bfloat16
    s1 = raw["gamma1"] / jnp.sqrt(raw["var1"] + BN_EPS)
    s2 = raw["gamma2"] / jnp.sqrt(raw["var2"] + BN_EPS)
    w1f = (raw["w1"] * s1).astype(f32)                       # per-column scaling
    b1f = ((raw["b1"] - raw["mean1"]) * s1 + raw["beta1"]).astype(f32)
    w2f = (raw["w2"] * s2).astype(bf16)
    b2f = ((raw["b2"] - raw["mean2"]) * s2 + raw["beta2"]).astype(f32)

    c_pad = ((num_classes + LANE - 1) // LANE) * LANE
    # padded w3 columns are exactly zero (exact in bf16 too) ...
    w3p = (jnp.zeros((HIDDEN2, c_pad), f32)
           .at[:, :num_classes].set(raw["w3"])).astype(bf16)
    # ... so the -1e30 bias makes exp() kill the padded class logits.
    b3p = jnp.full((1, c_pad), NEG_BIG, f32).at[:, :num_classes].set(raw["b3"])
    return dict(w1=w1f, b1=b1f, w2=w2f, b2=b2f, w3=w3p, b3=b3p), c_pad


def gcn_kernel(x_ref, a_ref, r_ref, w1_ref, b1_ref, w2_ref, b2_ref,
               w3_ref, b3_ref, out_ref):
    total_g, n_pad, f0 = x_ref.shape          # total_g = CHUNK * G graphs
    g = r_ref.shape[0]                        # G graphs per matmul group
    rows = g * n_pad                          # 384 MXU rows per group
    chunk = total_g // g                      # static trace-time constant
    bf16 = jnp.bfloat16

    a = a_ref[...]                            # (rows, rows) bf16, I_G (x) A_hat
    r = r_ref[...]                            # (g, rows)    bf16, I_G (x) mean-row
    w1 = w1_ref[...]                          # (f0, 64) f32 (VPU path)
    b1 = b1_ref[...]
    w2 = w2_ref[...]                          # bf16
    b2 = b2_ref[...]
    w3 = w3_ref[...]                          # bf16
    b3 = b3_ref[...]

    # Fully-unrolled chunk loop (static trip count): independent per-chunk MXU
    # chains interleave, amortizing per-step overhead and MRF-pop latency.
    for c in range(chunk):
        xc = x_ref[pl.ds(c * g, g), :, :].reshape(rows, f0)   # graph-major f32

        # ---- layer 1: relu(bn1(conv1(x))), BN folded into w1/b1 ----
        # K = f0 (=3) is far too small for the MXU -> VPU broadcast FMAs.
        if f0 <= 8:
            h = xc[:, 0:1] * w1[0:1, :]
            for k in range(1, f0):
                h = h + xc[:, k:k + 1] * w1[k:k + 1, :]
        else:
            h = jnp.dot(xc.astype(bf16), w1.astype(bf16),
                        preferred_element_type=jnp.float32)
        h = jnp.dot(a, h.astype(bf16), preferred_element_type=jnp.float32) + b1
        h = jnp.maximum(h, 0.0)
        # dropout(p=0.5) -> identity in eval mode

        # ---- layer 2: relu(bn2(conv2(h))) ----
        h = jnp.dot(h.astype(bf16), w2, preferred_element_type=jnp.float32)
        h = jnp.dot(a, h.astype(bf16), preferred_element_type=jnp.float32) + b2
        h = jnp.maximum(h, 0.0)
        # dropout -> identity

        # ---- layer 3 fused with global_mean_pool:
        #      mean_n(A @ (H @ W3) + b3) == (r @ H) @ W3 + b3 ----
        pooled = jnp.dot(r, h.astype(bf16),
                         preferred_element_type=jnp.float32)            # (G, 128)
        logits = jnp.dot(pooled.astype(bf16), w3,
                         preferred_element_type=jnp.float32) + b3       # (G, C_pad)

        # ---- log_softmax (f32) over the lane-padded class axis ----
        m = jnp.max(logits, axis=-1, keepdims=True)
        z = logits - m
        lse = jnp.log(jnp.sum(jnp.exp(z), axis=-1, keepdims=True))
        out_ref[pl.ds(c * g, g), :] = z - lse          # lane-dense (G, 128) store


def gcn_forward(x, folded, a_big, r_big, num_classes, c_pad,
                graphs_per_block=GRAPHS_PER_BLOCK, chunk_max=CHUNK_MAX):
    B, n, f0 = x.shape
    g = graphs_per_block
    n_groups = pl.cdiv(B, g)
    # Fuse several G-groups per step to amortize per-step overhead, but keep
    # >= 2 grid steps whenever >= 2 groups exist so both v7x TensorCores get
    # work via dimension_semantics=("parallel",).
    chunk = max(1, min(chunk_max, n_groups // 2))
    gpstep = g * chunk
    b_pad = pl.cdiv(B, gpstep) * gpstep
    steps = b_pad // gpstep

    # host-side layout prep: pad batch to a multiple of G*CHUNK, nodes 23 -> 24
    x_p = jnp.zeros((b_pad, N_PAD, f0), jnp.float32).at[:B, :n, :].set(x)

    def const(arr):
        nd = arr.ndim
        return pl.BlockSpec(arr.shape, lambda i: (0,) * nd)

    in_specs = [
        pl.BlockSpec((gpstep, N_PAD, f0), lambda i: (i, 0, 0)),  # CHUNK*G graphs
        const(a_big), const(r_big),
        const(folded["w1"]), const(folded["b1"]),
        const(folded["w2"]), const(folded["b2"]),
        const(folded["w3"]), const(folded["b3"]),
    ]
    out_spec = pl.BlockSpec((gpstep, c_pad), lambda i: (i, 0))

    out = pl.pallas_call(
        gcn_kernel,
        out_shape=jax.ShapeDtypeStruct((b_pad, c_pad), jnp.float32),
        grid_spec=pltpu.PrefetchScalarGridSpec(
            num_scalar_prefetch=0,
            grid=(steps,),
            in_specs=in_specs,
            out_specs=out_spec,
        ),
        compiler_params=pltpu.CompilerParams(
            dimension_semantics=("parallel",)),
    )(x_p, a_big, r_big,
      folded["w1"], folded["b1"], folded["w2"], folded["b2"],
      folded["w3"], folded["b3"])
    return out[:B, :num_classes]


def init_params(key, num_features, num_classes):
    f32 = jnp.float32
    ks = jax.random.split(key, 10)

    def lin(kw, kb, fan_in, fan_out):
        w = 0.1 * jax.random.normal(kw, (fan_in, fan_out), f32)
        b = 0.01 * jax.random.normal(kb, (1, fan_out), f32)
        return w, b

    w1, b1 = lin(ks[0], ks[1], num_features, HIDDEN1)
    w2, b2 = lin(ks[2], ks[3], HIDDEN1, HIDDEN2)
    w3, b3 = lin(ks[4], ks[5], HIDDEN2, num_classes)

    # BatchNorm1d eval-mode statistics of a freshly constructed module
    return dict(
        w1=w1, b1=b1, w2=w2, b2=b2, w3=w3, b3=b3,
        gamma1=1.0 + 0.1 * jax.random.normal(ks[6], (1, HIDDEN1), f32),
        beta1=0.1 * jax.random.normal(ks[7], (1, HIDDEN1), f32),
        gamma2=1.0 + 0.1 * jax.random.normal(ks[8], (1, HIDDEN2), f32),
        beta2=0.1 * jax.random.normal(ks[9], (1, HIDDEN2), f32),
        mean1=jnp.zeros((1, HIDDEN1), f32), var1=jnp.ones((1, HIDDEN1), f32),
        mean2=jnp.zeros((1, HIDDEN2), f32), var2=jnp.ones((1, HIDDEN2), f32),
    )


def gcn_reference(x, raw):
    """Pure-JAX f32 eval-mode forward (unpadded, per-graph) for validation."""
    a = jnp.asarray(normalized_adjacency())              # (23, 23)

    def bn(h, gamma, beta, mean, var):
        return (h - mean) / jnp.sqrt(var + BN_EPS) * gamma + beta

    def conv(h, w, b):
        return jnp.einsum('nm,bmf->bnf', a, h @ w) + b

    h = jnp.maximum(bn(conv(x, raw["w1"], raw["b1"]),
                       raw["gamma1"], raw["beta1"], raw["mean1"], raw["var1"]), 0.0)
    h = jnp.maximum(bn(conv(h, raw["w2"], raw["b2"]),
                       raw["gamma2"], raw["beta2"], raw["mean2"], raw["var2"]), 0.0)
    h = conv(h, raw["w3"], raw["b3"])
    pooled = jnp.mean(h, axis=1)
    return jax.nn.log_softmax(pooled, axis=-1)


if __name__ == "__main__":
    key = jax.random.PRNGKey(0)
    B = 2               # graphs in the batch
    num_features = 3    # (x, y, confidence) per keypoint
    num_classes = 8

    k_x, k_p = jax.random.split(key)
    x = jax.random.normal(k_x, (B, N_NODES, num_features), jnp.float32)
    raw = init_params(k_p, num_features, num_classes)

    folded, c_pad = fold_params(raw, num_classes)
    a_big, r_big = build_graph_constants(GRAPHS_PER_BLOCK)

    log_probs = gcn_forward(x, folded, a_big, r_big, num_classes, c_pad)
    log_probs = jax.block_until_ready(log_probs)

    assert log_probs.shape == (B, num_classes)
    # rows of log_softmax must exp-sum to 1 (softmax is computed in f32)
    assert bool(jnp.all(jnp.abs(jnp.sum(jnp.exp(log_probs), axis=1) - 1.0) < 1e-4))
    # must match the pure-JAX f32 reference; tolerance relaxed for the bf16
    # MXU operands (accumulation is f32 via preferred_element_type).
    ref = gcn_reference(x, raw)
    assert bool(jnp.max(jnp.abs(log_probs - ref)) < 1e-2), \
        float(jnp.max(jnp.abs(log_probs - ref)))
    print("KERNEL_OK")
</pallas_src>

<mosaic_0001>
module attributes {stable_mosaic.version = 11 : i64} {
  func.func @gcn_kernel(%arg0: i32, %arg1: memref<16x24x3xf32, #tpu.memory_space<vmem>>, %arg2: memref<384x384xbf16, #tpu.memory_space<vmem>>, %arg3: memref<16x384xbf16, #tpu.memory_space<vmem>>, %arg4: memref<3x64xf32, #tpu.memory_space<vmem>>, %arg5: memref<1x64xf32, #tpu.memory_space<vmem>>, %arg6: memref<64x128xbf16, #tpu.memory_space<vmem>>, %arg7: memref<1x128xf32, #tpu.memory_space<vmem>>, %arg8: memref<128x128xbf16, #tpu.memory_space<vmem>>, %arg9: memref<1x128xf32, #tpu.memory_space<vmem>>, %arg10: memref<16x128xf32, #tpu.memory_space<vmem>>) attributes {dimension_semantics = [#tpu.dimension_semantics<parallel>], iteration_bounds = array<i64: 1>, scalar_prefetch = 0 : i64, scratch_operands = 0 : i64, tpu.core_type = #tpu.core_type<tc>, window_params = [{transform_indices = @transform_0, window_bounds = array<i64: 16, 24, 3>}, {pipeline_mode = #tpu.pipeline_mode<synchronous>, transform_indices = @transform_1, window_bounds = array<i64: 384, 384>}, {pipeline_mode = #tpu.pipeline_mode<synchronous>, transform_indices = @transform_2, window_bounds = array<i64: 16, 384>}, {pipeline_mode = #tpu.pipeline_mode<synchronous>, transform_indices = @transform_3, window_bounds = array<i64: 3, 64>}, {pipeline_mode = #tpu.pipeline_mode<synchronous>, transform_indices = @transform_4, window_bounds = array<i64: 1, 64>}, {pipeline_mode = #tpu.pipeline_mode<synchronous>, transform_indices = @transform_5, window_bounds = array<i64: 64, 128>}, {pipeline_mode = #tpu.pipeline_mode<synchronous>, transform_indices = @transform_6, window_bounds = array<i64: 1, 128>}, {pipeline_mode = #tpu.pipeline_mode<synchronous>, transform_indices = @transform_7, window_bounds = array<i64: 128, 128>}, {pipeline_mode = #tpu.pipeline_mode<synchronous>, transform_indices = @transform_8, window_bounds = array<i64: 1, 128>}, {transform_indices = @transform_9, window_bounds = array<i64: 16, 128>}]} {
    %c0 = arith.constant 0 : index
    %c0_0 = arith.constant 0 : index
    %0 = vector.load %arg2[%c0, %c0_0] : memref<384x384xbf16, #tpu.memory_space<vmem>>, vector<384x384xbf16>
    %c0_1 = arith.constant 0 : index
    %c0_2 = arith.constant 0 : index
    %1 = vector.load %arg3[%c0_1, %c0_2] : memref<16x384xbf16, #tpu.memory_space<vmem>>, vector<16x384xbf16>
    %c0_3 = arith.constant 0 : index
    %c0_4 = arith.constant 0 : index
    %2 = vector.load %arg4[%c0_3, %c0_4] : memref<3x64xf32, #tpu.memory_space<vmem>>, vector<3x64xf32>
    %c0_5 = arith.constant 0 : index
    %c0_6 = arith.constant 0 : index
    %3 = vector.load %arg5[%c0_5, %c0_6] : memref<1x64xf32, #tpu.memory_space<vmem>>, vector<1x64xf32>
    %c0_7 = arith.constant 0 : index
    %c0_8 = arith.constant 0 : index
    %4 = vector.load %arg6[%c0_7, %c0_8] : memref<64x128xbf16, #tpu.memory_space<vmem>>, vector<64x128xbf16>
    %c0_9 = arith.constant 0 : index
    %c0_10 = arith.constant 0 : index
    %5 = vector.load %arg7[%c0_9, %c0_10] : memref<1x128xf32, #tpu.memory_space<vmem>>, vector<1x128xf32>
    %c0_11 = arith.constant 0 : index
    %c0_12 = arith.constant 0 : index
    %6 = vector.load %arg8[%c0_11, %c0_12] : memref<128x128xbf16, #tpu.memory_space<vmem>>, vector<128x128xbf16>
    %c0_13 = arith.constant 0 : index
    %c0_14 = arith.constant 0 : index
    %7 = vector.load %arg9[%c0_13, %c0_14] : memref<1x128xf32, #tpu.memory_space<vmem>>, vector<1x128xf32>
    %c0_15 = arith.constant 0 : index
    %c0_16 = arith.constant 0 : index
    %c0_17 = arith.constant 0 : index
    %8 = vector.load %arg1[%c0_15, %c0_16, %c0_17] : memref<16x24x3xf32, #tpu.memory_space<vmem>>, vector<16x24x3xf32>
    %9 = vector.shape_cast %8 : vector<16x24x3xf32> to vector<384x3xf32>
    %10 = vector.extract_strided_slice %9 {offsets = [0, 0], sizes = [384, 1], strides = [1, 1]} : vector<384x3xf32> to vector<384x1xf32>
    %11 = vector.extract_strided_slice %2 {offsets = [0, 0], sizes = [1, 64], strides = [1, 1]} : vector<3x64xf32> to vector<1x64xf32>
    %12 = vector.broadcast %10 : vector<384x1xf32> to vector<384x64xf32>
    %13 = vector.broadcast %11 : vector<1x64xf32> to vector<384x64xf32>
    %14 = arith.mulf %12, %13 : vector<384x64xf32>
    %15 = vector.extract_strided_slice %9 {offsets = [0, 1], sizes = [384, 1], strides = [1, 1]} : vector<384x3xf32> to vector<384x1xf32>
    %16 = vector.extract_strided_slice %2 {offsets = [1, 0], sizes = [1, 64], strides = [1, 1]} : vector<3x64xf32> to vector<1x64xf32>
    %17 = vector.broadcast %15 : vector<384x1xf32> to vector<384x64xf32>
    %18 = vector.broadcast %16 : vector<1x64xf32> to vector<384x64xf32>
    %19 = arith.mulf %17, %18 : vector<384x64xf32>
    %20 = arith.addf %14, %19 : vector<384x64xf32>
    %21 = vector.extract_strided_slice %9 {offsets = [0, 2], sizes = [384, 1], strides = [1, 1]} : vector<384x3xf32> to vector<384x1xf32>
    %22 = vector.extract_strided_slice %2 {offsets = [2, 0], sizes = [1, 64], strides = [1, 1]} : vector<3x64xf32> to vector<1x64xf32>
    %23 = vector.broadcast %21 : vector<384x1xf32> to vector<384x64xf32>
    %24 = vector.broadcast %22 : vector<1x64xf32> to vector<384x64xf32>
    %25 = arith.mulf %23, %24 : vector<384x64xf32>
    %26 = arith.addf %20, %25 : vector<384x64xf32>
    %27 = arith.truncf %26 : vector<384x64xf32> to vector<384x64xbf16>
    %cst = arith.constant dense<0.000000e+00> : vector<384x64xf32>
    %28 = tpu.matmul %0, %27, %cst {dimension_numbers = #tpu.dot_dimension_numbers<[1], [0], [0], [1], [0, 0, 1, 1], [], []>} : vector<384x384xbf16>, vector<384x64xbf16>, vector<384x64xf32> -> vector<384x64xf32>
    %29 = vector.broadcast %3 : vector<1x64xf32> to vector<384x64xf32>
    %30 = arith.addf %28, %29 : vector<384x64xf32>
    %cst_18 = arith.constant 0.000000e+00 : f32
    %31 = vector.broadcast %cst_18 : f32 to vector<384x64xf32>
    %32 = arith.maximumf %30, %31 : vector<384x64xf32>
    %33 = arith.truncf %32 : vector<384x64xf32> to vector<384x64xbf16>
    %cst_19 = arith.constant dense<0.000000e+00> : vector<384x128xf32>
    %34 = tpu.matmul %33, %4, %cst_19 {dimension_numbers = #tpu.dot_dimension_numbers<[1], [0], [0], [1], [0, 0, 1, 1], [], []>} : vector<384x64xbf16>, vector<64x128xbf16>, vector<384x128xf32> -> vector<384x128xf32>
    %35 = arith.truncf %34 : vector<384x128xf32> to vector<384x128xbf16>
    %cst_20 = arith.constant dense<0.000000e+00> : vector<384x128xf32>
    %36 = tpu.matmul %0, %35, %cst_20 {dimension_numbers = #tpu.dot_dimension_numbers<[1], [0], [0], [1], [0, 0, 1, 1], [], []>} : vector<384x384xbf16>, vector<384x128xbf16>, vector<384x128xf32> -> vector<384x128xf32>
    %37 = vector.broadcast %5 : vector<1x128xf32> to vector<384x128xf32>
    %38 = arith.addf %36, %37 : vector<384x128xf32>
    %cst_21 = arith.constant 0.000000e+00 : f32
    %39 = vector.broadcast %cst_21 : f32 to vector<384x128xf32>
    %40 = arith.maximumf %38, %39 : vector<384x128xf32>
    %41 = arith.truncf %40 : vector<384x128xf32> to vector<384x128xbf16>
    %cst_22 = arith.constant dense<0.000000e+00> : vector<16x128xf32>
    %42 = tpu.matmul %1, %41, %cst_22 {dimension_numbers = #tpu.dot_dimension_numbers<[1], [0], [0], [1], [0, 0, 1, 1], [], []>} : vector<16x384xbf16>, vector<384x128xbf16>, vector<16x128xf32> -> vector<16x128xf32>
    %43 = arith.truncf %42 : vector<16x128xf32> to vector<16x128xbf16>
    %cst_23 = arith.constant dense<0.000000e+00> : vector<16x128xf32>
    %44 = tpu.matmul %43, %6, %cst_23 {dimension_numbers = #tpu.dot_dimension_numbers<[1], [0], [0], [1], [0, 0, 1, 1], [], []>} : vector<16x128xbf16>, vector<128x128xbf16>, vector<16x128xf32> -> vector<16x128xf32>
    %45 = vector.broadcast %7 : vector<1x128xf32> to vector<16x128xf32>
    %46 = arith.addf %44, %45 : vector<16x128xf32>
    %cst_24 = arith.constant dense<0xFF800000> : vector<16xf32>
    %47 = vector.multi_reduction <maximumf>, %46, %cst_24 [1] : vector<16x128xf32> to vector<16xf32>
    %48 = vector.shape_cast %47 : vector<16xf32> to vector<16x1xf32>
    %49 = vector.broadcast %48 : vector<16x1xf32> to vector<16x128xf32>
    %50 = arith.subf %46, %49 : vector<16x128xf32>
    %51 = math.exp %50 : vector<16x128xf32>
    %cst_25 = arith.constant dense<0.000000e+00> : vector<16xf32>
    %52 = vector.multi_reduction <add>, %51, %cst_25 [1] : vector<16x128xf32> to vector<16xf32>
    %53 = vector.shape_cast %52 : vector<16xf32> to vector<16x1xf32>
    %54 = math.log %53 : vector<16x1xf32>
    %55 = vector.broadcast %54 : vector<16x1xf32> to vector<16x128xf32>
    %56 = arith.subf %50, %55 : vector<16x128xf32>
    %c0_26 = arith.constant 0 : index
    %c0_27 = arith.constant 0 : index
    %57 = vector.load %arg10[%c0_26, %c0_27] : memref<16x128xf32, #tpu.memory_space<vmem>>, vector<16x128xf32>
    tpu.vector_store %arg10[%c0_26, %c0_27], %56 {strides = array<i32>} : memref<16x128xf32, #tpu.memory_space<vmem>>, vector<16x128xf32>,
    return
  }
  func.func @transform_0(%arg0: i32) -> (i32, i32, i32) {
    %c0_i32 = arith.constant 0 : i32
    %c0_i32_0 = arith.constant 0 : i32
    %c0_i32_1 = arith.constant 0 : i32
    return %arg0, %c0_i32, %c0_i32_0 : i32, i32, i32
  }
  func.func @transform_1(%arg0: i32) -> (i32, i32) {
    %c0_i32 = arith.constant 0 : i32
    %c0_i32_0 = arith.constant 0 : i32
    %c0_i32_1 = arith.constant 0 : i32
    return %c0_i32, %c0_i32_0 : i32, i32
  }
  func.func @transform_2(%arg0: i32) -> (i32, i32) {
    %c0_i32 = arith.constant 0 : i32
    %c0_i32_0 = arith.constant 0 : i32
    %c0_i32_1 = arith.constant 0 : i32
    return %c0_i32, %c0_i32_0 : i32, i32
  }
  func.func @transform_3(%arg0: i32) -> (i32, i32) {
    %c0_i32 = arith.constant 0 : i32
    %c0_i32_0 = arith.constant 0 : i32
    %c0_i32_1 = arith.constant 0 : i32
    return %c0_i32, %c0_i32_0 : i32, i32
  }
  func.func @transform_4(%arg0: i32) -> (i32, i32) {
    %c0_i32 = arith.constant 0 : i32
    %c0_i32_0 = arith.constant 0 : i32
    %c0_i32_1 = arith.constant 0 : i32
    return %c0_i32, %c0_i32_0 : i32, i32
  }
  func.func @transform_5(%arg0: i32) -> (i32, i32) {
    %c0_i32 = arith.constant 0 : i32
    %c0_i32_0 = arith.constant 0 : i32
    %c0_i32_1 = arith.constant 0 : i32
    return %c0_i32, %c0_i32_0 : i32, i32
  }
  func.func @transform_6(%arg0: i32) -> (i32, i32) {
    %c0_i32 = arith.constant 0 : i32
    %c0_i32_0 = arith.constant 0 : i32
    %c0_i32_1 = arith.constant 0 : i32
    return %c0_i32, %c0_i32_0 : i32, i32
  }
  func.func @transform_7(%arg0: i32) -> (i32, i32) {
    %c0_i32 = arith.constant 0 : i32
    %c0_i32_0 = arith.constant 0 : i32
    %c0_i32_1 = arith.constant 0 : i32
    return %c0_i32, %c0_i32_0 : i32, i32
  }
  func.func @transform_8(%arg0: i32) -> (i32, i32) {
    %c0_i32 = arith.constant 0 : i32
    %c0_i32_0 = arith.constant 0 : i32
    %c0_i32_1 = arith.constant 0 : i32
    return %c0_i32, %c0_i32_0 : i32, i32
  }
  func.func @transform_9(%arg0: i32) -> (i32, i32) {
    %c0_i32 = arith.constant 0 : i32
    %c0_i32_0 = arith.constant 0 : i32
    return %arg0, %c0_i32 : i32, i32
  }
}

</mosaic_0001>

<llo_original>
// kernel: tpu_custom_call.1
$region0: #{tpu_custom_call.1}
  #allocation0 [shape = 'u32[]', space=smem, size = 0x4, offset = 0x4, fixed_abs, tag = 'smem constant byte address 0x4 - core index']
  #allocation1 [shape = 'u32[72,128]{1,0:T(1,128)}', space=vmem, size = 0x9000, scoped, tag = 'internal scratch']
  %s0 = inlined_call_operand.vmem [shape: f32[16,24,3], index: 0, kind: input, shape index: {}]
  %s1 = inlined_call_operand.hbm [shape: bf16[384,384], index: 1, kind: input, shape index: {}]
  %s2 = inlined_call_operand.vmem [shape: bf16[16,384], index: 2, kind: input, shape index: {}]
  %s3 = inlined_call_operand.vmem [shape: f32[3,64], index: 3, kind: input, shape index: {}]
  %s4 = inlined_call_operand.vmem [shape: f32[1,64], index: 4, kind: input, shape index: {}]
  %s5 = inlined_call_operand.vmem [shape: bf16[64,128], index: 5, kind: input, shape index: {}]
  %s6 = inlined_call_operand.vmem [shape: f32[1,128], index: 6, kind: input, shape index: {}]
  %s7 = inlined_call_operand.vmem [shape: bf16[128,128], index: 7, kind: input, shape index: {}]
  %s8 = inlined_call_operand.vmem [shape: f32[1,128], index: 8, kind: input, shape index: {}]
  %s9 = inlined_call_operand.hbm [shape: f32[16,128], index: 9, kind: output, shape index: {}]
  %s10 = sld [smem:[#allocation0]]
  $region50: #{tpu_custom_call.1} parent=0
    _
  %s12 = ssub.s32 1, %s10
  %s13 = scalar_select 0, %s12, %s10
  $region1: #{tpu_custom_call.1} parent=0
    #allocation2 [shape = 'u8[294912]{0}', space=vmem, size = 0x48000, scoped, tag = 'input window, operand 1, single buffered']
    #allocation3 [shape = 's32[1]{0}', space=sflag, size = 0x4, scoped, tag = 'scoped memory for tpu_custom_call.1']
    #allocation4 [shape = 's32[1]{0}', space=sflag, size = 0x4, scoped, tag = 'scoped memory for tpu_custom_call.1']
    #allocation5 [shape = 'u8[8192]{0}', space=vmem, size = 0x2000, scoped, tag = 'output window, operand 0, single buffered']
    %14 = vsyncpa [#allocation3], 0
    %15 = vsyncpa [#allocation4], 0
    // Predicated region
    $region2: #{tpu_custom_call.1} parent=1 // pred_check
      _
    $region3: #{tpu_custom_call.1} parent=1 // pred_check_branch
      %17 = sbr.rel (0) target = $region5
    $region4: #{tpu_custom_call.1} parent=1 // pred_region
      _
    $region5: #{tpu_custom_call.1} parent=1 // pred_fallthru
      _
    // Predicated region
    $region6: #{tpu_custom_call.1} parent=1 // pred_check
      _
    $region7: #{tpu_custom_call.1} parent=1 // pred_check_branch
      %19 = sbr.rel (0) target = $region9
    $region8: #{tpu_custom_call.1} parent=1 // pred_region
      %21 = vsyncadd [#allocation3], 0
      %s22 = sshll.u32 %s1, 4
      %s23 = int_to_ptr.hbm [resolvable:$true] %s22
      %s24 = sshll.u32 [#allocation2], 4
      %s25 = int_to_ptr.vmem [resolvable:$true] %s24
      %30 = dma.hbm_to_vmem [thread:$0]  %s23, 9216, %s25, [#allocation3], 192, 192, 12
    $region9: #{tpu_custom_call.1} parent=1 // pred_fallthru
      _
    // Predicated region
    $region10: #{tpu_custom_call.1} parent=1 // pred_check
      _
    $region11: #{tpu_custom_call.1} parent=1 // pred_check_branch
      %32 = sbr.rel (0) target = $region13
    $region12: #{tpu_custom_call.1} parent=1 // pred_region
      _
    $region13: #{tpu_custom_call.1} parent=1 // pred_fallthru
      _
    // Predicated region
    $region14: #{tpu_custom_call.1} parent=1 // pred_check
      _
    $region15: #{tpu_custom_call.1} parent=1 // pred_check_branch
      %34 = sbr.rel (0) target = $region17
    $region16: #{tpu_custom_call.1} parent=1 // pred_region
      _
    $region17: #{tpu_custom_call.1} parent=1 // pred_fallthru
      _
    // Predicated region
    $region18: #{tpu_custom_call.1} parent=1 // pred_check
      _
    $region19: #{tpu_custom_call.1} parent=1 // pred_check_branch
      %36 = sbr.rel (0) target = $region21
    $region20: #{tpu_custom_call.1} parent=1 // pred_region
      _
    $region21: #{tpu_custom_call.1} parent=1 // pred_fallthru
      _
    // Predicated region
    $region22: #{tpu_custom_call.1} parent=1 // pred_check
      _
    $region23: #{tpu_custom_call.1} parent=1 // pred_check_branch
      %38 = sbr.rel (0) target = $region25
    $region24: #{tpu_custom_call.1} parent=1 // pred_region
      _
    $region25: #{tpu_custom_call.1} parent=1 // pred_fallthru
      _
    // Predicated region
    $region26: #{tpu_custom_call.1} parent=1 // pred_check
      _
    $region27: #{tpu_custom_call.1} parent=1 // pred_check_branch
      %40 = sbr.rel (0) target = $region29
    $region28: #{tpu_custom_call.1} parent=1 // pred_region
      _
    $region29: #{tpu_custom_call.1} parent=1 // pred_fallthru
      _
    // Predicated region
    $region30: #{tpu_custom_call.1} parent=1 // pred_check
      _
    $region31: #{tpu_custom_call.1} parent=1 // pred_check_branch
      %42 = sbr.rel (0) target = $region33
    $region32: #{tpu_custom_call.1} parent=1 // pred_region
      _
    $region33: #{tpu_custom_call.1} parent=1 // pred_fallthru
      _
    // Predicated region
    $region34: #{tpu_custom_call.1} parent=1 // pred_check
      _
    $region35: #{tpu_custom_call.1} parent=1 // pred_check_branch
      %44 = sbr.rel (0) target = $region37
    $region36: #{tpu_custom_call.1} parent=1 // pred_region
      _
    $region37: #{tpu_custom_call.1} parent=1 // pred_fallthru
      _
    // Predicated region
    $region38: #{tpu_custom_call.1} parent=1 // pred_check
      _
    $region39: #{tpu_custom_call.1} parent=1 // pred_check_branch
      %46 = sbr.rel (0) target = $region41
    $region40: #{tpu_custom_call.1} parent=1 // pred_region
      %48 = dma.done [#allocation3], 9216
    $region41: #{tpu_custom_call.1} parent=1 // pred_fallthru
      _
    %v50 = vld [vmem:[#allocation2] sm:$0xff]
    %v51 = vld [vmem:[#allocation2 + $0x8] sm:$0xf]
    %v52 = vld [vmem:[#allocation2 + $0xc] sm:$0xff]
    %v53 = vld [vmem:[#allocation2 + $0x14] sm:$0xf]
    %v54 = vld [vmem:[#allocation2 + $0x18] sm:$0xff]
    %v55 = vld [vmem:[#allocation2 + $0x20] sm:$0xf]
    %v56 = vld [vmem:[#allocation2 + $0x24] sm:$0xff]
    %v57 = vld [vmem:[#allocation2 + $0x2c] sm:$0xf]
    %v58 = vld [vmem:[#allocation2 + $0x30] sm:$0xff]
    %v59 = vld [vmem:[#allocation2 + $0x38] sm:$0xf]
    %v60 = vld [vmem:[#allocation2 + $0x3c] sm:$0xff]
    %v61 = vld [vmem:[#allocation2 + $0x44] sm:$0xf]
    %v62 = vld [vmem:[#allocation2 + $0x48] sm:$0xff]
    %v63 = vld [vmem:[#allocation2 + $0x50] sm:$0xf]
    %v64 = vld [vmem:[#allocation2 + $0x54] sm:$0xff]
    %v65 = vld [vmem:[#allocation2 + $0x5c] sm:$0xf]
    %v66 = vld [vmem:[#allocation2 + $0x60] sm:$0xff]
    %v67 = vld [vmem:[#allocation2 + $0x68] sm:$0xf]
    %v68 = vld [vmem:[#allocation2 + $0x6c] sm:$0xff]
    %v69 = vld [vmem:[#allocation2 + $0x74] sm:$0xf]
    %v70 = vld [vmem:[#allocation2 + $0x78] sm:$0xff]
    %v71 = vld [vmem:[#allocation2 + $0x80] sm:$0xf]
    %v72 = vld [vmem:[#allocation2 + $0x84] sm:$0xff]
    %v73 = vld [vmem:[#allocation2 + $0x8c] sm:$0xf]
    %v74 = vld [vmem:[#allocation2 + $0x90] sm:$0xff]
    %v75 = vld [vmem:[#allocation2 + $0x98] sm:$0xf]
    %v76 = vld [vmem:[#allocation2 + $0x9c] sm:$0xff]
    %v77 = vld [vmem:[#allocation2 + $0xa4] sm:$0xf]
    %v78 = vld [vmem:[#allocation2 + $0xa8] sm:$0xff]
    %v79 = vld [vmem:[#allocation2 + $0xb0] sm:$0xf]
    %v80 = vld [vmem:[#allocation2 + $0xb4] sm:$0xff]
    %v81 = vld [vmem:[#allocation2 + $0xbc] sm:$0xf]
    %v82 = vld [vmem:[#allocation2 + $0xc0] sm:$0xff]
    %v83 = vld [vmem:[#allocation2 + $0xc8] sm:$0xf]
    %v84 = vld [vmem:[#allocation2 + $0xcc] sm:$0xff]
    %v85 = vld [vmem:[#allocation2 + $0xd4] sm:$0xf]
    %v86 = vld [vmem:[#allocation2 + $0xd8] sm:$0xff]
    %v87 = vld [vmem:[#allocation2 + $0xe0] sm:$0xf]
    %v88 = vld [vmem:[#allocation2 + $0xe4] sm:$0xff]
    %v89 = vld [vmem:[#allocation2 + $0xec] sm:$0xf]
    %v90 = vld [vmem:[#allocation2 + $0xf0] sm:$0xff]
    %v91 = vld [vmem:[#allocation2 + $0xf8] sm:$0xf]
    %v92 = vld [vmem:[#allocation2 + $0xfc] sm:$0xff]
    %v93 = vld [vmem:[#allocation2 + $0x104] sm:$0xf]
    %v94 = vld [vmem:[#allocation2 + $0x108] sm:$0xff]
    %v95 = vld [vmem:[#allocation2 + $0x110] sm:$0xf]
    %v96 = vld [vmem:[#allocation2 + $0x114] sm:$0xff]
    %v97 = vld [vmem:[#allocation2 + $0x11c] sm:$0xf]
    %v98 = vld [vmem:[#allocation2 + $0x120] sm:$0xff]
    %v99 = vld [vmem:[#allocation2 + $0x128] sm:$0xf]
    %v100 = vld [vmem:[#allocation2 + $0x12c] sm:$0xff]
    %v101 = vld [vmem:[#allocation2 + $0x134] sm:$0xf]
    %v102 = vld [vmem:[#allocation2 + $0x138] sm:$0xff]
    %v103 = vld [vmem:[#allocation2 + $0x140] sm:$0xf]
    %v104 = vld [vmem:[#allocation2 + $0x144] sm:$0xff]
    %v105 = vld [vmem:[#allocation2 + $0x14c] sm:$0xf]
    %v106 = vld [vmem:[#allocation2 + $0x150] sm:$0xff]
    %v107 = vld [vmem:[#allocation2 + $0x158] sm:$0xf]
    %v108 = vld [vmem:[#allocation2 + $0x15c] sm:$0xff]
    %v109 = vld [vmem:[#allocation2 + $0x164] sm:$0xf]
    %v110 = vld [vmem:[#allocation2 + $0x168] sm:$0xff]
    %v111 = vld [vmem:[#allocation2 + $0x170] sm:$0xf]
    %v112 = vld [vmem:[#allocation2 + $0x174] sm:$0xff]
    %v113 = vld [vmem:[#allocation2 + $0x17c] sm:$0xf]
    %v114 = vld [vmem:[#allocation2 + $0x180] sm:$0xff]
    %v115 = vld [vmem:[#allocation2 + $0x188] sm:$0xf]
    %v116 = vld [vmem:[#allocation2 + $0x18c] sm:$0xff]
    %v117 = vld [vmem:[#allocation2 + $0x194] sm:$0xf]
    %v118 = vld [vmem:[#allocation2 + $0x198] sm:$0xff]
    %v119 = vld [vmem:[#allocation2 + $0x1a0] sm:$0xf]
    %v120 = vld [vmem:[#allocation2 + $0x1a4] sm:$0xff]
    %v121 = vld [vmem:[#allocation2 + $0x1ac] sm:$0xf]
    %v122 = vld [vmem:[#allocation2 + $0x1b0] sm:$0xff]
    %v123 = vld [vmem:[#allocation2 + $0x1b8] sm:$0xf]
    %v124 = vld [vmem:[#allocation2 + $0x1bc] sm:$0xff]
    %v125 = vld [vmem:[#allocation2 + $0x1c4] sm:$0xf]
    %v126 = vld [vmem:[#allocation2 + $0x1c8] sm:$0xff]
    %v127 = vld [vmem:[#allocation2 + $0x1d0] sm:$0xf]
    %v128 = vld [vmem:[#allocation2 + $0x1d4] sm:$0xff]
    %v129 = vld [vmem:[#allocation2 + $0x1dc] sm:$0xf]
    %v130 = vld [vmem:[#allocation2 + $0x1e0] sm:$0xff]
    %v131 = vld [vmem:[#allocation2 + $0x1e8] sm:$0xf]
    %v132 = vld [vmem:[#allocation2 + $0x1ec] sm:$0xff]
    %v133 = vld [vmem:[#allocation2 + $0x1f4] sm:$0xf]
    %v134 = vld [vmem:[#allocation2 + $0x1f8] sm:$0xff]
    %v135 = vld [vmem:[#allocation2 + $0x200] sm:$0xf]
    %v136 = vld [vmem:[#allocation2 + $0x204] sm:$0xff]
    %v137 = vld [vmem:[#allocation2 + $0x20c] sm:$0xf]
    %v138 = vld [vmem:[#allocation2 + $0x210] sm:$0xff]
    %v139 = vld [vmem:[#allocation2 + $0x218] sm:$0xf]
    %v140 = vld [vmem:[#allocation2 + $0x21c] sm:$0xff]
    %v141 = vld [vmem:[#allocation2 + $0x224] sm:$0xf]
    %v142 = vld [vmem:[#allocation2 + $0x228] sm:$0xff]
    %v143 = vld [vmem:[#allocation2 + $0x230] sm:$0xf]
    %v144 = vld [vmem:[#allocation2 + $0x234] sm:$0xff]
    %v145 = vld [vmem:[#allocation2 + $0x23c] sm:$0xf]
    %v146 = vld [vmem:[%s2] sm:$0xff]
    %v147 = vld [vmem:[%s2 + $0x8] sm:$0xf]
    %v148 = vld [vmem:[%s2 + $0xc] sm:$0xff]
    %v149 = vld [vmem:[%s2 + $0x14] sm:$0xf]
    %v150 = vld [vmem:[%s3] sm:$0x7]
    %v151 = vld [vmem:[%s4] sm:$0x1]
    %v152 = vld [vmem:[%s5] sm:$0xf]
    %v153 = vld [vmem:[%s5 + $0x4] sm:$0xf]
    %v154 = vld [vmem:[%s5 + $0x8] sm:$0xf]
    %v155 = vld [vmem:[%s5 + $0xc] sm:$0xf]
    %v156 = vld [vmem:[%s5 + $0x10] sm:$0xf]
    %v157 = vld [vmem:[%s5 + $0x14] sm:$0xf]
    %v158 = vld [vmem:[%s5 + $0x18] sm:$0xf]
    %v159 = vld [vmem:[%s5 + $0x1c] sm:$0xf]
    %v160 = vld [vmem:[%s6] sm:$0x1]
    %v161 = vld [vmem:[%s7] sm:$0xf]
    %v162 = vld [vmem:[%s7 + $0x4] sm:$0xf]
    %v163 = vld [vmem:[%s7 + $0x8] sm:$0xf]
    %v164 = vld [vmem:[%s7 + $0xc] sm:$0xf]
    %v165 = vld [vmem:[%s7 + $0x10] sm:$0xf]
    %v166 = vld [vmem:[%s7 + $0x14] sm:$0xf]
    %v167 = vld [vmem:[%s7 + $0x18] sm:$0xf]
    %v168 = vld [vmem:[%s7 + $0x1c] sm:$0xf]
    %v169 = vld [vmem:[%s7 + $0x20] sm:$0xf]
    %v170 = vld [vmem:[%s7 + $0x24] sm:$0xf]
    %v171 = vld [vmem:[%s7 + $0x28] sm:$0xf]
    %v172 = vld [vmem:[%s7 + $0x2c] sm:$0xf]
    %v173 = vld [vmem:[%s7 + $0x30] sm:$0xf]
    %v174 = vld [vmem:[%s7 + $0x34] sm:$0xf]
    %v175 = vld [vmem:[%s7 + $0x38] sm:$0xf]
    %v176 = vld [vmem:[%s7 + $0x3c] sm:$0xf]
    %v177 = vld [vmem:[%s8] sm:$0x1]
    %v178 = vld [vmem:[%s0] sm:$0xff]
    %v179 = vld [vmem:[%s0 + $0x8] sm:$0xff]
    %v180 = vld [vmem:[%s0 + $0x10] sm:$0xff]
    %v181 = vld [vmem:[%s0 + $0x18] sm:$0xff]
    %v182 = vld [vmem:[%s0 + $0x20] sm:$0xff]
    %v183 = vld [vmem:[%s0 + $0x28] sm:$0xff]
    %v184 = vld [vmem:[%s0 + $0x30] sm:$0xff]
    %v185 = vld [vmem:[%s0 + $0x38] sm:$0xff]
    %v186 = vld [vmem:[%s0 + $0x40] sm:$0xff]
    %v187 = vld [vmem:[%s0 + $0x48] sm:$0xff]
    %v188 = vld [vmem:[%s0 + $0x50] sm:$0xff]
    %v189 = vld [vmem:[%s0 + $0x58] sm:$0xff]
    %v190 = vld [vmem:[%s0 + $0x60] sm:$0xff]
    %v191 = vld [vmem:[%s0 + $0x68] sm:$0xff]
    %v192 = vld [vmem:[%s0 + $0x70] sm:$0xff]
    %v193 = vld [vmem:[%s0 + $0x78] sm:$0xff]
    %v194 = vld [vmem:[%s0 + $0x80] sm:$0xff]
    %v195 = vld [vmem:[%s0 + $0x88] sm:$0xff]
    %v196 = vld [vmem:[%s0 + $0x90] sm:$0xff]
    %v197 = vld [vmem:[%s0 + $0x98] sm:$0xff]
    %v198 = vld [vmem:[%s0 + $0xa0] sm:$0xff]
    %v199 = vld [vmem:[%s0 + $0xa8] sm:$0xff]
    %v200 = vld [vmem:[%s0 + $0xb0] sm:$0xff]
    %v201 = vld [vmem:[%s0 + $0xb8] sm:$0xff]
    %v202 = vld [vmem:[%s0 + $0xc0] sm:$0xff]
    %v203 = vld [vmem:[%s0 + $0xc8] sm:$0xff]
    %v204 = vld [vmem:[%s0 + $0xd0] sm:$0xff]
    %v205 = vld [vmem:[%s0 + $0xd8] sm:$0xff]
    %v206 = vld [vmem:[%s0 + $0xe0] sm:$0xff]
    %v207 = vld [vmem:[%s0 + $0xe8] sm:$0xff]
    %v208 = vld [vmem:[%s0 + $0xf0] sm:$0xff]
    %v209 = vld [vmem:[%s0 + $0xf8] sm:$0xff]
    %v210 = vld [vmem:[%s0 + $0x100] sm:$0xff]
    %v211 = vld [vmem:[%s0 + $0x108] sm:$0xff]
    %v212 = vld [vmem:[%s0 + $0x110] sm:$0xff]
    %v213 = vld [vmem:[%s0 + $0x118] sm:$0xff]
    %v214 = vld [vmem:[%s0 + $0x120] sm:$0xff]
    %v215 = vld [vmem:[%s0 + $0x128] sm:$0xff]
    %v216 = vld [vmem:[%s0 + $0x130] sm:$0xff]
    %v217 = vld [vmem:[%s0 + $0x138] sm:$0xff]
    %v218 = vld [vmem:[%s0 + $0x140] sm:$0xff]
    %v219 = vld [vmem:[%s0 + $0x148] sm:$0xff]
    %v220 = vld [vmem:[%s0 + $0x150] sm:$0xff]
    %v221 = vld [vmem:[%s0 + $0x158] sm:$0xff]
    %v222 = vld [vmem:[%s0 + $0x160] sm:$0xff]
    %v223 = vld [vmem:[%s0 + $0x168] sm:$0xff]
    %v224 = vld [vmem:[%s0 + $0x170] sm:$0xff]
    %v225 = vld [vmem:[%s0 + $0x178] sm:$0xff]
    %227 = vset.pattern.permute.xlu0 0
    %228 = vperm.xlu0 %227, %v178
    %v229 = vpop.permute.xlu0 %228
    %232 = vset.pattern.permute.xlu0 0
    %233 = vperm.xlu0 %232, %v179
    %v234 = vpop.permute.xlu0 %233
    %237 = vset.pattern.permute.xlu0 0
    %238 = vperm.xlu0 %237, %v180
    %v239 = vpop.permute.xlu0 %238
    %242 = vset.pattern.permute.xlu0 0
    %243 = vperm.xlu0 %242, %v181
    %v244 = vpop.permute.xlu0 %243
    %247 = vset.pattern.permute.xlu0 0
    %248 = vperm.xlu0 %247, %v182
    %v249 = vpop.permute.xlu0 %248
    %252 = vset.pattern.permute.xlu0 0
    %253 = vperm.xlu0 %252, %v183
    %v254 = vpop.permute.xlu0 %253
    %257 = vset.pattern.permute.xlu0 0
    %258 = vperm.xlu0 %257, %v184
    %v259 = vpop.permute.xlu0 %258
    %262 = vset.pattern.permute.xlu0 0
    %263 = vperm.xlu0 %262, %v185
    %v264 = vpop.permute.xlu0 %263
    %267 = vset.pattern.permute.xlu0 0
    %268 = vperm.xlu0 %267, %v186
    %v269 = vpop.permute.xlu0 %268
    %272 = vset.pattern.permute.xlu0 0
    %273 = vperm.xlu0 %272, %v187
    %v274 = vpop.permute.xlu0 %273
    %277 = vset.pattern.permute.xlu0 0
    %278 = vperm.xlu0 %277, %v188
    %v279 = vpop.permute.xlu0 %278
    %282 = vset.pattern.permute.xlu0 0
    %283 = vperm.xlu0 %282, %v189
    %v284 = vpop.permute.xlu0 %283
    %287 = vset.pattern.permute.xlu0 0
    %288 = vperm.xlu0 %287, %v190
    %v289 = vpop.permute.xlu0 %288
    %292 = vset.pattern.permute.xlu0 0
    %293 = vperm.xlu0 %292, %v191
    %v294 = vpop.permute.xlu0 %293
    %297 = vset.pattern.permute.xlu0 0
    %298 = vperm.xlu0 %297, %v192
    %v299 = vpop.permute.xlu0 %298
    %302 = vset.pattern.permute.xlu0 0
    %303 = vperm.xlu0 %302, %v193
    %v304 = vpop.permute.xlu0 %303
    %307 = vset.pattern.permute.xlu0 0
    %308 = vperm.xlu0 %307, %v194
    %v309 = vpop.permute.xlu0 %308
    %312 = vset.pattern.permute.xlu0 0
    %313 = vperm.xlu0 %312, %v195
    %v314 = vpop.permute.xlu0 %313
    %317 = vset.pattern.permute.xlu0 0
    %318 = vperm.xlu0 %317, %v196
    %v319 = vpop.permute.xlu0 %318
    %322 = vset.pattern.permute.xlu0 0
    %323 = vperm.xlu0 %322, %v197
    %v324 = vpop.permute.xlu0 %323
    %327 = vset.pattern.permute.xlu0 0
    %328 = vperm.xlu0 %327, %v198
    %v329 = vpop.permute.xlu0 %328
    %332 = vset.pattern.permute.xlu0 0
    %333 = vperm.xlu0 %332, %v199
    %v334 = vpop.permute.xlu0 %333
    %337 = vset.pattern.permute.xlu0 0
    %338 = vperm.xlu0 %337, %v200
    %v339 = vpop.permute.xlu0 %338
    %342 = vset.pattern.permute.xlu0 0
    %343 = vperm.xlu0 %342, %v201
    %v344 = vpop.permute.xlu0 %343
    %347 = vset.pattern.permute.xlu0 0
    %348 = vperm.xlu0 %347, %v202
    %v349 = vpop.permute.xlu0 %348
    %352 = vset.pattern.permute.xlu0 0
    %353 = vperm.xlu0 %352, %v203
    %v354 = vpop.permute.xlu0 %353
    %357 = vset.pattern.permute.xlu0 0
    %358 = vperm.xlu0 %357, %v204
    %v359 = vpop.permute.xlu0 %358
    %362 = vset.pattern.permute.xlu0 0
    %363 = vperm.xlu0 %362, %v205
    %v364 = vpop.permute.xlu0 %363
    %367 = vset.pattern.permute.xlu0 0
    %368 = vperm.xlu0 %367, %v206
    %v369 = vpop.permute.xlu0 %368
    %372 = vset.pattern.permute.xlu0 0
    %373 = vperm.xlu0 %372, %v207
    %v374 = vpop.permute.xlu0 %373
    %377 = vset.pattern.permute.xlu0 0
    %378 = vperm.xlu0 %377, %v208
    %v379 = vpop.permute.xlu0 %378
    %382 = vset.pattern.permute.xlu0 0
    %383 = vperm.xlu0 %382, %v209
    %v384 = vpop.permute.xlu0 %383
    %387 = vset.pattern.permute.xlu0 0
    %388 = vperm.xlu0 %387, %v210
    %v389 = vpop.permute.xlu0 %388
    %392 = vset.pattern.permute.xlu0 0
    %393 = vperm.xlu0 %392, %v211
    %v394 = vpop.permute.xlu0 %393
    %397 = vset.pattern.permute.xlu0 0
    %398 = vperm.xlu0 %397, %v212
    %v399 = vpop.permute.xlu0 %398
    %402 = vset.pattern.permute.xlu0 0
    %403 = vperm.xlu0 %402, %v213
    %v404 = vpop.permute.xlu0 %403
    %407 = vset.pattern.permute.xlu0 0
    %408 = vperm.xlu0 %407, %v214
    %v409 = vpop.permute.xlu0 %408
    %412 = vset.pattern.permute.xlu0 0
    %413 = vperm.xlu0 %412, %v215
    %v414 = vpop.permute.xlu0 %413
    %417 = vset.pattern.permute.xlu0 0
    %418 = vperm.xlu0 %417, %v216
    %v419 = vpop.permute.xlu0 %418
    %422 = vset.pattern.permute.xlu0 0
    %423 = vperm.xlu0 %422, %v217
    %v424 = vpop.permute.xlu0 %423
    %427 = vset.pattern.permute.xlu0 0
    %428 = vperm.xlu0 %427, %v218
    %v429 = vpop.permute.xlu0 %428
    %432 = vset.pattern.permute.xlu0 0
    %433 = vperm.xlu0 %432, %v219
    %v434 = vpop.permute.xlu0 %433
    %437 = vset.pattern.permute.xlu0 0
    %438 = vperm.xlu0 %437, %v220
    %v439 = vpop.permute.xlu0 %438
    %442 = vset.pattern.permute.xlu0 0
    %443 = vperm.xlu0 %442, %v221
    %v444 = vpop.permute.xlu0 %443
    %447 = vset.pattern.permute.xlu0 0
    %448 = vperm.xlu0 %447, %v222
    %v449 = vpop.permute.xlu0 %448
    %452 = vset.pattern.permute.xlu0 0
    %453 = vperm.xlu0 %452, %v223
    %v454 = vpop.permute.xlu0 %453
    %457 = vset.pattern.permute.xlu0 0
    %458 = vperm.xlu0 %457, %v224
    %v459 = vpop.permute.xlu0 %458
    %462 = vset.pattern.permute.xlu0 0
    %463 = vperm.xlu0 %462, %v225
    %v464 = vpop.permute.xlu0 %463
    %v466 = vperm.slane %v150, 0
    %v467 = vmul.f32 %v229, %v466
    %v468 = vmul.f32 %v234, %v466
    %v469 = vmul.f32 %v239, %v466
    %v470 = vmul.f32 %v244, %v466
    %v471 = vmul.f32 %v249, %v466
    %v472 = vmul.f32 %v254, %v466
    %v473 = vmul.f32 %v259, %v466
    %v474 = vmul.f32 %v264, %v466
    %v475 = vmul.f32 %v269, %v466
    %v476 = vmul.f32 %v274, %v466
    %v477 = vmul.f32 %v279, %v466
    %v478 = vmul.f32 %v284, %v466
    %v479 = vmul.f32 %v289, %v466
    %v480 = vmul.f32 %v294, %v466
    %v481 = vmul.f32 %v299, %v466
    %v482 = vmul.f32 %v304, %v466
    %v483 = vmul.f32 %v309, %v466
    %v484 = vmul.f32 %v314, %v466
    %v485 = vmul.f32 %v319, %v466
    %v486 = vmul.f32 %v324, %v466
    %v487 = vmul.f32 %v329, %v466
    %v488 = vmul.f32 %v334, %v466
    %v489 = vmul.f32 %v339, %v466
    %v490 = vmul.f32 %v344, %v466
    %v491 = vmul.f32 %v349, %v466
    %v492 = vmul.f32 %v354, %v466
    %v493 = vmul.f32 %v359, %v466
    %v494 = vmul.f32 %v364, %v466
    %v495 = vmul.f32 %v369, %v466
    %v496 = vmul.f32 %v374, %v466
    %v497 = vmul.f32 %v379, %v466
    %v498 = vmul.f32 %v384, %v466
    %v499 = vmul.f32 %v389, %v466
    %v500 = vmul.f32 %v394, %v466
    %v501 = vmul.f32 %v399, %v466
    %v502 = vmul.f32 %v404, %v466
    %v503 = vmul.f32 %v409, %v466
    %v504 = vmul.f32 %v414, %v466
    %v505 = vmul.f32 %v419, %v466
    %v506 = vmul.f32 %v424, %v466
    %v507 = vmul.f32 %v429, %v466
    %v508 = vmul.f32 %v434, %v466
    %v509 = vmul.f32 %v439, %v466
    %v510 = vmul.f32 %v444, %v466
    %v511 = vmul.f32 %v449, %v466
    %v512 = vmul.f32 %v454, %v466
    %v513 = vmul.f32 %v459, %v466
    %v514 = vmul.f32 %v464, %v466
    %515 = vset.pattern.permute.xlu0 1
    %516 = vperm.xlu0 %515, %v178
    %v517 = vpop.permute.xlu0 %516
    %519 = vset.pattern.permute.xlu0 1
    %520 = vperm.xlu0 %519, %v179
    %v521 = vpop.permute.xlu0 %520
    %523 = vset.pattern.permute.xlu0 1
    %524 = vperm.xlu0 %523, %v180
    %v525 = vpop.permute.xlu0 %524
    %527 = vset.pattern.permute.xlu0 1
    %528 = vperm.xlu0 %527, %v181
    %v529 = vpop.permute.xlu0 %528
    %531 = vset.pattern.permute.xlu0 1
    %532 = vperm.xlu0 %531, %v182
    %v533 = vpop.permute.xlu0 %532
    %535 = vset.pattern.permute.xlu0 1
    %536 = vperm.xlu0 %535, %v183
    %v537 = vpop.permute.xlu0 %536
    %539 = vset.pattern.permute.xlu0 1
    %540 = vperm.xlu0 %539, %v184
    %v541 = vpop.permute.xlu0 %540
    %543 = vset.pattern.permute.xlu0 1
    %544 = vperm.xlu0 %543, %v185
    %v545 = vpop.permute.xlu0 %544
    %547 = vset.pattern.permute.xlu0 1
    %548 = vperm.xlu0 %547, %v186
    %v549 = vpop.permute.xlu0 %548
    %551 = vset.pattern.permute.xlu0 1
    %552 = vperm.xlu0 %551, %v187
    %v553 = vpop.permute.xlu0 %552
    %555 = vset.pattern.permute.xlu0 1
    %556 = vperm.xlu0 %555, %v188
    %v557 = vpop.permute.xlu0 %556
    %559 = vset.pattern.permute.xlu0 1
    %560 = vperm.xlu0 %559, %v189
    %v561 = vpop.permute.xlu0 %560
    %563 = vset.pattern.permute.xlu0 1
    %564 = vperm.xlu0 %563, %v190
    %v565 = vpop.permute.xlu0 %564
    %567 = vset.pattern.permute.xlu0 1
    %568 = vperm.xlu0 %567, %v191
    %v569 = vpop.permute.xlu0 %568
    %571 = vset.pattern.permute.xlu0 1
    %572 = vperm.xlu0 %571, %v192
    %v573 = vpop.permute.xlu0 %572
    %575 = vset.pattern.permute.xlu0 1
    %576 = vperm.xlu0 %575, %v193
    %v577 = vpop.permute.xlu0 %576
    %579 = vset.pattern.permute.xlu0 1
    %580 = vperm.xlu0 %579, %v194
    %v581 = vpop.permute.xlu0 %580
    %583 = vset.pattern.permute.xlu0 1
    %584 = vperm.xlu0 %583, %v195
    %v585 = vpop.permute.xlu0 %584
    %587 = vset.pattern.permute.xlu0 1
    %588 = vperm.xlu0 %587, %v196
    %v589 = vpop.permute.xlu0 %588
    %591 = vset.pattern.permute.xlu0 1
    %592 = vperm.xlu0 %591, %v197
    %v593 = vpop.permute.xlu0 %592
    %595 = vset.pattern.permute.xlu0 1
    %596 = vperm.xlu0 %595, %v198
    %v597 = vpop.permute.xlu0 %596
    %599 = vset.pattern.permute.xlu0 1
    %600 = vperm.xlu0 %599, %v199
    %v601 = vpop.permute.xlu0 %600
    %603 = vset.pattern.permute.xlu0 1
    %604 = vperm.xlu0 %603, %v200
    %v605 = vpop.permute.xlu0 %604
    %607 = vset.pattern.permute.xlu0 1
    %608 = vperm.xlu0 %607, %v201
    %v609 = vpop.permute.xlu0 %608
    %611 = vset.pattern.permute.xlu0 1
    %612 = vperm.xlu0 %611, %v202
    %v613 = vpop.permute.xlu0 %612
    %615 = vset.pattern.permute.xlu0 1
    %616 = vperm.xlu0 %615, %v203
    %v617 = vpop.permute.xlu0 %616
    %619 = vset.pattern.permute.xlu0 1
    %620 = vperm.xlu0 %619, %v204
    %v621 = vpop.permute.xlu0 %620
    %623 = vset.pattern.permute.xlu0 1
    %624 = vperm.xlu0 %623, %v205
    %v625 = vpop.permute.xlu0 %624
    %627 = vset.pattern.permute.xlu0 1
    %628 = vperm.xlu0 %627, %v206
    %v629 = vpop.permute.xlu0 %628
    %631 = vset.pattern.permute.xlu0 1
    %632 = vperm.xlu0 %631, %v207
    %v633 = vpop.permute.xlu0 %632
    %635 = vset.pattern.permute.xlu0 1
    %636 = vperm.xlu0 %635, %v208
    %v637 = vpop.permute.xlu0 %636
    %639 = vset.pattern.permute.xlu0 1
    %640 = vperm.xlu0 %639, %v209
    %v641 = vpop.permute.xlu0 %640
    %643 = vset.pattern.permute.xlu0 1
    %644 = vperm.xlu0 %643, %v210
    %v645 = vpop.permute.xlu0 %644
    %647 = vset.pattern.permute.xlu0 1
    %648 = vperm.xlu0 %647, %v211
    %v649 = vpop.permute.xlu0 %648
    %651 = vset.pattern.permute.xlu0 1
    %652 = vperm.xlu0 %651, %v212
    %v653 = vpop.permute.xlu0 %652
    %655 = vset.pattern.permute.xlu0 1
    %656 = vperm.xlu0 %655, %v213
    %v657 = vpop.permute.xlu0 %656
    %659 = vset.pattern.permute.xlu0 1
    %660 = vperm.xlu0 %659, %v214
    %v661 = vpop.permute.xlu0 %660
    %663 = vset.pattern.permute.xlu0 1
    %664 = vperm.xlu0 %663, %v215
    %v665 = vpop.permute.xlu0 %664
    %667 = vset.pattern.permute.xlu0 1
    %668 = vperm.xlu0 %667, %v216
    %v669 = vpop.permute.xlu0 %668
    %671 = vset.pattern.permute.xlu0 1
    %672 = vperm.xlu0 %671, %v217
    %v673 = vpop.permute.xlu0 %672
    %675 = vset.pattern.permute.xlu0 1
    %676 = vperm.xlu0 %675, %v218
    %v677 = vpop.permute.xlu0 %676
    %679 = vset.pattern.permute.xlu0 1
    %680 = vperm.xlu0 %679, %v219
    %v681 = vpop.permute.xlu0 %680
    %683 = vset.pattern.permute.xlu0 1
    %684 = vperm.xlu0 %683, %v220
    %v685 = vpop.permute.xlu0 %684
    %687 = vset.pattern.permute.xlu0 1
    %688 = vperm.xlu0 %687, %v221
    %v689 = vpop.permute.xlu0 %688
    %691 = vset.pattern.permute.xlu0 1
    %692 = vperm.xlu0 %691, %v222
    %v693 = vpop.permute.xlu0 %692
    %695 = vset.pattern.permute.xlu0 1
    %696 = vperm.xlu0 %695, %v223
    %v697 = vpop.permute.xlu0 %696
    %699 = vset.pattern.permute.xlu0 1
    %700 = vperm.xlu0 %699, %v224
    %v701 = vpop.permute.xlu0 %700
    %703 = vset.pattern.permute.xlu0 1
    %704 = vperm.xlu0 %703, %v225
    %v705 = vpop.permute.xlu0 %704
    %v707 = vperm.slane %v150, 1
    %v708 = vmul.f32 %v517, %v707
    %v709 = vmul.f32 %v521, %v707
    %v710 = vmul.f32 %v525, %v707
    %v711 = vmul.f32 %v529, %v707
    %v712 = vmul.f32 %v533, %v707
    %v713 = vmul.f32 %v537, %v707
    %v714 = vmul.f32 %v541, %v707
    %v715 = vmul.f32 %v545, %v707
    %v716 = vmul.f32 %v549, %v707
    %v717 = vmul.f32 %v553, %v707
    %v718 = vmul.f32 %v557, %v707
    %v719 = vmul.f32 %v561, %v707
    %v720 = vmul.f32 %v565, %v707
    %v721 = vmul.f32 %v569, %v707
    %v722 = vmul.f32 %v573, %v707
    %v723 = vmul.f32 %v577, %v707
    %v724 = vmul.f32 %v581, %v707
    %v725 = vmul.f32 %v585, %v707
    %v726 = vmul.f32 %v589, %v707
    %v727 = vmul.f32 %v593, %v707
    %v728 = vmul.f32 %v597, %v707
    %v729 = vmul.f32 %v601, %v707
    %v730 = vmul.f32 %v605, %v707
    %v731 = vmul.f32 %v609, %v707
    %v732 = vmul.f32 %v613, %v707
    %v733 = vmul.f32 %v617, %v707
    %v734 = vmul.f32 %v621, %v707
    %v735 = vmul.f32 %v625, %v707
    %v736 = vmul.f32 %v629, %v707
    %v737 = vmul.f32 %v633, %v707
    %v738 = vmul.f32 %v637, %v707
    %v739 = vmul.f32 %v641, %v707
    %v740 = vmul.f32 %v645, %v707
    %v741 = vmul.f32 %v649, %v707
    %v742 = vmul.f32 %v653, %v707
    %v743 = vmul.f32 %v657, %v707
    %v744 = vmul.f32 %v661, %v707
    %v745 = vmul.f32 %v665, %v707
    %v746 = vmul.f32 %v669, %v707
    %v747 = vmul.f32 %v673, %v707
    %v748 = vmul.f32 %v677, %v707
    %v749 = vmul.f32 %v681, %v707
    %v750 = vmul.f32 %v685, %v707
    %v751 = vmul.f32 %v689, %v707
    %v752 = vmul.f32 %v693, %v707
    %v753 = vmul.f32 %v697, %v707
    %v754 = vmul.f32 %v701, %v707
    %v755 = vmul.f32 %v705, %v707
    %v756 = vadd.f32 %v467, %v708
    %v757 = vadd.f32 %v468, %v709
    %v758 = vadd.f32 %v469, %v710
    %v759 = vadd.f32 %v470, %v711
    %v760 = vadd.f32 %v471, %v712
    %v761 = vadd.f32 %v472, %v713
    %v762 = vadd.f32 %v473, %v714
    %v763 = vadd.f32 %v474, %v715
    %v764 = vadd.f32 %v475, %v716
    %v765 = vadd.f32 %v476, %v717
    %v766 = vadd.f32 %v477, %v718
    %v767 = vadd.f32 %v478, %v719
    %v768 = vadd.f32 %v479, %v720
    %v769 = vadd.f32 %v480, %v721
    %v770 = vadd.f32 %v481, %v722
    %v771 = vadd.f32 %v482, %v723
    %v772 = vadd.f32 %v483, %v724
    %v773 = vadd.f32 %v484, %v725
    %v774 = vadd.f32 %v485, %v726
    %v775 = vadd.f32 %v486, %v727
    %v776 = vadd.f32 %v487, %v728
    %v777 = vadd.f32 %v488, %v729
    %v778 = vadd.f32 %v489, %v730
    %v779 = vadd.f32 %v490, %v731
    %v780 = vadd.f32 %v491, %v732
    %v781 = vadd.f32 %v492, %v733
    %v782 = vadd.f32 %v493, %v734
    %v783 = vadd.f32 %v494, %v735
    %v784 = vadd.f32 %v495, %v736
    %v785 = vadd.f32 %v496, %v737
    %v786 = vadd.f32 %v497, %v738
    %v787 = vadd.f32 %v498, %v739
    %v788 = vadd.f32 %v499, %v740
    %v789 = vadd.f32 %v500, %v741
    %v790 = vadd.f32 %v501, %v742
    %v791 = vadd.f32 %v502, %v743
    %v792 = vadd.f32 %v503, %v744
    %v793 = vadd.f32 %v504, %v745
    %v794 = vadd.f32 %v505, %v746
    %v795 = vadd.f32 %v506, %v747
    %v796 = vadd.f32 %v507, %v748
    %v797 = vadd.f32 %v508, %v749
    %v798 = vadd.f32 %v509, %v750
    %v799 = vadd.f32 %v510, %v751
    %v800 = vadd.f32 %v511, %v752
    %v801 = vadd.f32 %v512, %v753
    %v802 = vadd.f32 %v513, %v754
    %v803 = vadd.f32 %v514, %v755
    %804 = vset.pattern.permute.xlu0 2
    %805 = vperm.xlu0 %804, %v178
    %v806 = vpop.permute.xlu0 %805
    %808 = vset.pattern.permute.xlu0 2
    %809 = vperm.xlu0 %808, %v179
    %v810 = vpop.permute.xlu0 %809
    %812 = vset.pattern.permute.xlu0 2
    %813 = vperm.xlu0 %812, %v180
    %v814 = vpop.permute.xlu0 %813
    %816 = vset.pattern.permute.xlu0 2
    %817 = vperm.xlu0 %816, %v181
    %v818 = vpop.permute.xlu0 %817
    %820 = vset.pattern.permute.xlu0 2
    %821 = vperm.xlu0 %820, %v182
    %v822 = vpop.permute.xlu0 %821
    %824 = vset.pattern.permute.xlu0 2
    %825 = vperm.xlu0 %824, %v183
    %v826 = vpop.permute.xlu0 %825
    %828 = vset.pattern.permute.xlu0 2
    %829 = vperm.xlu0 %828, %v184
    %v830 = vpop.permute.xlu0 %829
    %832 = vset.pattern.permute.xlu0 2
    %833 = vperm.xlu0 %832, %v185
    %v834 = vpop.permute.xlu0 %833
    %836 = vset.pattern.permute.xlu0 2
    %837 = vperm.xlu0 %836, %v186
    %v838 = vpop.permute.xlu0 %837
    %840 = vset.pattern.permute.xlu0 2
    %841 = vperm.xlu0 %840, %v187
    %v842 = vpop.permute.xlu0 %841
    %844 = vset.pattern.permute.xlu0 2
    %845 = vperm.xlu0 %844, %v188
    %v846 = vpop.permute.xlu0 %845
    %848 = vset.pattern.permute.xlu0 2
    %849 = vperm.xlu0 %848, %v189
    %v850 = vpop.permute.xlu0 %849
    %852 = vset.pattern.permute.xlu0 2
    %853 = vperm.xlu0 %852, %v190
    %v854 = vpop.permute.xlu0 %853
    %856 = vset.pattern.permute.xlu0 2
    %857 = vperm.xlu0 %856, %v191
    %v858 = vpop.permute.xlu0 %857
    %860 = vset.pattern.permute.xlu0 2
    %861 = vperm.xlu0 %860, %v192
    %v862 = vpop.permute.xlu0 %861
    %864 = vset.pattern.permute.xlu0 2
    %865 = vperm.xlu0 %864, %v193
    %v866 = vpop.permute.xlu0 %865
    %868 = vset.pattern.permute.xlu0 2
    %869 = vperm.xlu0 %868, %v194
    %v870 = vpop.permute.xlu0 %869
    %872 = vset.pattern.permute.xlu0 2
    %873 = vperm.xlu0 %872, %v195
    %v874 = vpop.permute.xlu0 %873
    %876 = vset.pattern.permute.xlu0 2
    %877 = vperm.xlu0 %876, %v196
    %v878 = vpop.permute.xlu0 %877
    %880 = vset.pattern.permute.xlu0 2
    %881 = vperm.xlu0 %880, %v197
    %v882 = vpop.permute.xlu0 %881
    %884 = vset.pattern.permute.xlu0 2
    %885 = vperm.xlu0 %884, %v198
    %v886 = vpop.permute.xlu0 %885
    %888 = vset.pattern.permute.xlu0 2
    %889 = vperm.xlu0 %888, %v199
    %v890 = vpop.permute.xlu0 %889
    %892 = vset.pattern.permute.xlu0 2
    %893 = vperm.xlu0 %892, %v200
    %v894 = vpop.permute.xlu0 %893
    %896 = vset.pattern.permute.xlu0 2
    %897 = vperm.xlu0 %896, %v201
    %v898 = vpop.permute.xlu0 %897
    %900 = vset.pattern.permute.xlu0 2
    %901 = vperm.xlu0 %900, %v202
    %v902 = vpop.permute.xlu0 %901
    %904 = vset.pattern.permute.xlu0 2
    %905 = vperm.xlu0 %904, %v203
    %v906 = vpop.permute.xlu0 %905
    %908 = vset.pattern.permute.xlu0 2
    %909 = vperm.xlu0 %908, %v204
    %v910 = vpop.permute.xlu0 %909
    %912 = vset.pattern.permute.xlu0 2
    %913 = vperm.xlu0 %912, %v205
    %v914 = vpop.permute.xlu0 %913
    %916 = vset.pattern.permute.xlu0 2
    %917 = vperm.xlu0 %916, %v206
    %v918 = vpop.permute.xlu0 %917
    %920 = vset.pattern.permute.xlu0 2
    %921 = vperm.xlu0 %920, %v207
    %v922 = vpop.permute.xlu0 %921
    %924 = vset.pattern.permute.xlu0 2
    %925 = vperm.xlu0 %924, %v208
    %v926 = vpop.permute.xlu0 %925
    %928 = vset.pattern.permute.xlu0 2
    %929 = vperm.xlu0 %928, %v209
    %v930 = vpop.permute.xlu0 %929
    %932 = vset.pattern.permute.xlu0 2
    %933 = vperm.xlu0 %932, %v210
    %v934 = vpop.permute.xlu0 %933
    %936 = vset.pattern.permute.xlu0 2
    %937 = vperm.xlu0 %936, %v211
    %v938 = vpop.permute.xlu0 %937
    %940 = vset.pattern.permute.xlu0 2
    %941 = vperm.xlu0 %940, %v212
    %v942 = vpop.permute.xlu0 %941
    %944 = vset.pattern.permute.xlu0 2
    %945 = vperm.xlu0 %944, %v213
    %v946 = vpop.permute.xlu0 %945
    %948 = vset.pattern.permute.xlu0 2
    %949 = vperm.xlu0 %948, %v214
    %v950 = vpop.permute.xlu0 %949
    %952 = vset.pattern.permute.xlu0 2
    %953 = vperm.xlu0 %952, %v215
    %v954 = vpop.permute.xlu0 %953
    %956 = vset.pattern.permute.xlu0 2
    %957 = vperm.xlu0 %956, %v216
    %v958 = vpop.permute.xlu0 %957
    %960 = vset.pattern.permute.xlu0 2
    %961 = vperm.xlu0 %960, %v217
    %v962 = vpop.permute.xlu0 %961
    %964 = vset.pattern.permute.xlu0 2
    %965 = vperm.xlu0 %964, %v218
    %v966 = vpop.permute.xlu0 %965
    %968 = vset.pattern.permute.xlu0 2
    %969 = vperm.xlu0 %968, %v219
    %v970 = vpop.permute.xlu0 %969
    %972 = vset.pattern.permute.xlu0 2
    %973 = vperm.xlu0 %972, %v220
    %v974 = vpop.permute.xlu0 %973
    %976 = vset.pattern.permute.xlu0 2
    %977 = vperm.xlu0 %976, %v221
    %v978 = vpop.permute.xlu0 %977
    %980 = vset.pattern.permute.xlu0 2
    %981 = vperm.xlu0 %980, %v222
    %v982 = vpop.permute.xlu0 %981
    %984 = vset.pattern.permute.xlu0 2
    %985 = vperm.xlu0 %984, %v223
    %v986 = vpop.permute.xlu0 %985
    %988 = vset.pattern.permute.xlu0 2
    %989 = vperm.xlu0 %988, %v224
    %v990 = vpop.permute.xlu0 %989
    %992 = vset.pattern.permute.xlu0 2
    %993 = vperm.xlu0 %992, %v225
    %v994 = vpop.permute.xlu0 %993
    %v996 = vperm.slane %v150, 2
    %v997 = vmul.f32 %v806, %v996
    %v998 = vmul.f32 %v810, %v996
    %v999 = vmul.f32 %v814, %v996
    %v1000 = vmul.f32 %v818, %v996
    %v1001 = vmul.f32 %v822, %v996
    %v1002 = vmul.f32 %v826, %v996
    %v1003 = vmul.f32 %v830, %v996
    %v1004 = vmul.f32 %v834, %v996
    %v1005 = vmul.f32 %v838, %v996
    %v1006 = vmul.f32 %v842, %v996
    %v1007 = vmul.f32 %v846, %v996
    %v1008 = vmul.f32 %v850, %v996
    %v1009 = vmul.f32 %v854, %v996
    %v1010 = vmul.f32 %v858, %v996
    %v1011 = vmul.f32 %v862, %v996
    %v1012 = vmul.f32 %v866, %v996
    %v1013 = vmul.f32 %v870, %v996
    %v1014 = vmul.f32 %v874, %v996
    %v1015 = vmul.f32 %v878, %v996
    %v1016 = vmul.f32 %v882, %v996
    %v1017 = vmul.f32 %v886, %v996
    %v1018 = vmul.f32 %v890, %v996
    %v1019 = vmul.f32 %v894, %v996
    %v1020 = vmul.f32 %v898, %v996
    %v1021 = vmul.f32 %v902, %v996
    %v1022 = vmul.f32 %v906, %v996
    %v1023 = vmul.f32 %v910, %v996
    %v1024 = vmul.f32 %v914, %v996
    %v1025 = vmul.f32 %v918, %v996
    %v1026 = vmul.f32 %v922, %v996
    %v1027 = vmul.f32 %v926, %v996
    %v1028 = vmul.f32 %v930, %v996
    %v1029 = vmul.f32 %v934, %v996
    %v1030 = vmul.f32 %v938, %v996
    %v1031 = vmul.f32 %v942, %v996
    %v1032 = vmul.f32 %v946, %v996
    %v1033 = vmul.f32 %v950, %v996
    %v1034 = vmul.f32 %v954, %v996
    %v1035 = vmul.f32 %v958, %v996
    %v1036 = vmul.f32 %v962, %v996
    %v1037 = vmul.f32 %v966, %v996
    %v1038 = vmul.f32 %v970, %v996
    %v1039 = vmul.f32 %v974, %v996
    %v1040 = vmul.f32 %v978, %v996
    %v1041 = vmul.f32 %v982, %v996
    %v1042 = vmul.f32 %v986, %v996
    %v1043 = vmul.f32 %v990, %v996
    %v1044 = vmul.f32 %v994, %v996
    %v1045 = vadd.f32 %v756, %v997
    %v1046 = vadd.f32 %v757, %v998
    %v1047 = vadd.f32 %v758, %v999
    %v1048 = vadd.f32 %v759, %v1000
    %v1049 = vadd.f32 %v760, %v1001
    %v1050 = vadd.f32 %v761, %v1002
    %v1051 = vadd.f32 %v762, %v1003
    %v1052 = vadd.f32 %v763, %v1004
    %v1053 = vadd.f32 %v764, %v1005
    %v1054 = vadd.f32 %v765, %v1006
    %v1055 = vadd.f32 %v766, %v1007
    %v1056 = vadd.f32 %v767, %v1008
    %v1057 = vadd.f32 %v768, %v1009
    %v1058 = vadd.f32 %v769, %v1010
    %v1059 = vadd.f32 %v770, %v1011
    %v1060 = vadd.f32 %v771, %v1012
    %v1061 = vadd.f32 %v772, %v1013
    %v1062 = vadd.f32 %v773, %v1014
    %v1063 = vadd.f32 %v774, %v1015
    %v1064 = vadd.f32 %v775, %v1016
    %v1065 = vadd.f32 %v776, %v1017
    %v1066 = vadd.f32 %v777, %v1018
    %v1067 = vadd.f32 %v778, %v1019
    %v1068 = vadd.f32 %v779, %v1020
    %v1069 = vadd.f32 %v780, %v1021
    %v1070 = vadd.f32 %v781, %v1022
    %v1071 = vadd.f32 %v782, %v1023
    %v1072 = vadd.f32 %v783, %v1024
    %v1073 = vadd.f32 %v784, %v1025
    %v1074 = vadd.f32 %v785, %v1026
    %v1075 = vadd.f32 %v786, %v1027
    %v1076 = vadd.f32 %v787, %v1028
    %v1077 = vadd.f32 %v788, %v1029
    %v1078 = vadd.f32 %v789, %v1030
    %v1079 = vadd.f32 %v790, %v1031
    %v1080 = vadd.f32 %v791, %v1032
    %v1081 = vadd.f32 %v792, %v1033
    %v1082 = vadd.f32 %v793, %v1034
    %v1083 = vadd.f32 %v794, %v1035
    %v1084 = vadd.f32 %v795, %v1036
    %v1085 = vadd.f32 %v796, %v1037
    %v1086 = vadd.f32 %v797, %v1038
    %v1087 = vadd.f32 %v798, %v1039
    %v1088 = vadd.f32 %v799, %v1040
    %v1089 = vadd.f32 %v800, %v1041
    %v1090 = vadd.f32 %v801, %v1042
    %v1091 = vadd.f32 %v802, %v1043
    %v1092 = vadd.f32 %v803, %v1044
    %v1093 = vpack.c.bf16 %v1046, %v1045
    %v1094 = vpack.c.bf16 %v1048, %v1047
    %v1095 = vpack.c.bf16 %v1050, %v1049
    %v1096 = vpack.c.bf16 %v1052, %v1051
    %v1097 = vpack.c.bf16 %v1054, %v1053
    %v1098 = vpack.c.bf16 %v1056, %v1055
    %v1099 = vpack.c.bf16 %v1058, %v1057
    %v1100 = vpack.c.bf16 %v1060, %v1059
    %v1101 = vpack.c.bf16 %v1062, %v1061
    %v1102 = vpack.c.bf16 %v1064, %v1063
    %v1103 = vpack.c.bf16 %v1066, %v1065
    %v1104 = vpack.c.bf16 %v1068, %v1067
    %v1105 = vpack.c.bf16 %v1070, %v1069
    %v1106 = vpack.c.bf16 %v1072, %v1071
    %v1107 = vpack.c.bf16 %v1074, %v1073
    %v1108 = vpack.c.bf16 %v1076, %v1075
    %v1109 = vpack.c.bf16 %v1078, %v1077
    %v1110 = vpack.c.bf16 %v1080, %v1079
    %v1111 = vpack.c.bf16 %v1082, %v1081
    %v1112 = vpack.c.bf16 %v1084, %v1083
    %v1113 = vpack.c.bf16 %v1086, %v1085
    %v1114 = vpack.c.bf16 %v1088, %v1087
    %v1115 = vpack.c.bf16 %v1090, %v1089
    %v1116 = vpack.c.bf16 %v1092, %v1091
    %v1118 = vperm.slane %v151, 0
    %v1216 = vunpack.c.l.b16 %v50
    %v1217 = vunpack.c.h.b16 %v50
    %v1218 = vunpack.c.l.b16 %v51
    %v1219 = vunpack.c.l.b16 %v52
    %v1220 = vunpack.c.h.b16 %v52
    %v1221 = vunpack.c.l.b16 %v53
    %v1222 = vunpack.c.l.b16 %v54
    %v1223 = vunpack.c.h.b16 %v54
    %v1224 = vunpack.c.l.b16 %v55
    %v1225 = vunpack.c.l.b16 %v56
    %v1226 = vunpack.c.h.b16 %v56
    %v1227 = vunpack.c.l.b16 %v57
    %v1228 = vunpack.c.l.b16 %v58
    %v1229 = vunpack.c.h.b16 %v58
    %v1230 = vunpack.c.l.b16 %v59
    %v1231 = vunpack.c.l.b16 %v60
    %v1232 = vunpack.c.h.b16 %v60
    %v1233 = vunpack.c.l.b16 %v61
    %v1234 = vunpack.c.l.b16 %v62
    %v1235 = vunpack.c.h.b16 %v62
    %v1236 = vunpack.c.l.b16 %v63
    %v1237 = vunpack.c.l.b16 %v64
    %v1238 = vunpack.c.h.b16 %v64
    %v1239 = vunpack.c.l.b16 %v65
    %v1240 = vunpack.c.l.b16 %v66
    %v1241 = vunpack.c.h.b16 %v66
    %v1242 = vunpack.c.l.b16 %v67
    %v1243 = vunpack.c.l.b16 %v68
    %v1244 = vunpack.c.h.b16 %v68
    %v1245 = vunpack.c.l.b16 %v69
    %v1246 = vunpack.c.l.b16 %v70
    %v1247 = vunpack.c.h.b16 %v70
    %v1248 = vunpack.c.l.b16 %v71
    %v1249 = vunpack.c.l.b16 %v72
    %v1250 = vunpack.c.h.b16 %v72
    %v1251 = vunpack.c.l.b16 %v73
    %v1252 = vunpack.c.l.b16 %v74
    %v1253 = vunpack.c.h.b16 %v74
    %v1254 = vunpack.c.l.b16 %v75
    %v1255 = vunpack.c.l.b16 %v76
    %v1256 = vunpack.c.h.b16 %v76
    %v1257 = vunpack.c.l.b16 %v77
    %v1258 = vunpack.c.l.b16 %v78
    %v1259 = vunpack.c.h.b16 %v78
    %v1260 = vunpack.c.l.b16 %v79
    %v1261 = vunpack.c.l.b16 %v80
    %v1262 = vunpack.c.h.b16 %v80
    %v1263 = vunpack.c.l.b16 %v81
    %v1264 = vunpack.c.l.b16 %v82
    %v1265 = vunpack.c.h.b16 %v82
    %v1266 = vunpack.c.l.b16 %v83
    %v1267 = vunpack.c.l.b16 %v84
    %v1268 = vunpack.c.h.b16 %v84
    %v1269 = vunpack.c.l.b16 %v85
    %v1270 = vunpack.c.l.b16 %v86
    %v1271 = vunpack.c.h.b16 %v86
    %v1272 = vunpack.c.l.b16 %v87
    %v1273 = vunpack.c.l.b16 %v88
    %v1274 = vunpack.c.h.b16 %v88
    %v1275 = vunpack.c.l.b16 %v89
    %v1276 = vunpack.c.l.b16 %v90
    %v1277 = vunpack.c.h.b16 %v90
    %v1278 = vunpack.c.l.b16 %v91
    %v1279 = vunpack.c.l.b16 %v92
    %v1280 = vunpack.c.h.b16 %v92
    %v1281 = vunpack.c.l.b16 %v93
    %v1282 = vunpack.c.l.b16 %v94
    %v1283 = vunpack.c.h.b16 %v94
    %v1284 = vunpack.c.l.b16 %v95
    %v1285 = vunpack.c.l.b16 %v96
    %v1286 = vunpack.c.h.b16 %v96
    %v1287 = vunpack.c.l.b16 %v97
    %v1288 = vunpack.c.l.b16 %v98
    %v1289 = vunpack.c.h.b16 %v98
    %v1290 = vunpack.c.l.b16 %v99
    %v1291 = vunpack.c.l.b16 %v100
    %v1292 = vunpack.c.h.b16 %v100
    %v1293 = vunpack.c.l.b16 %v101
    %v1294 = vunpack.c.l.b16 %v102
    %v1295 = vunpack.c.h.b16 %v102
    %v1296 = vunpack.c.l.b16 %v103
    %v1297 = vunpack.c.l.b16 %v104
    %v1298 = vunpack.c.h.b16 %v104
    %v1299 = vunpack.c.l.b16 %v105
    %v1300 = vunpack.c.l.b16 %v106
    %v1301 = vunpack.c.h.b16 %v106
    %v1302 = vunpack.c.l.b16 %v107
    %v1303 = vunpack.c.l.b16 %v108
    %v1304 = vunpack.c.h.b16 %v108
    %v1305 = vunpack.c.l.b16 %v109
    %v1306 = vunpack.c.l.b16 %v110
    %v1307 = vunpack.c.h.b16 %v110
    %v1308 = vunpack.c.l.b16 %v111
    %v1309 = vunpack.c.l.b16 %v112
    %v1310 = vunpack.c.h.b16 %v112
    %v1311 = vunpack.c.l.b16 %v113
    %v1312 = vunpack.c.l.b16 %v114
    %v1313 = vunpack.c.h.b16 %v114
    %v1314 = vunpack.c.l.b16 %v115
    %v1315 = vunpack.c.l.b16 %v116
    %v1316 = vunpack.c.h.b16 %v116
    %v1317 = vunpack.c.l.b16 %v117
    %v1318 = vunpack.c.l.b16 %v118
    %v1319 = vunpack.c.h.b16 %v118
    %v1320 = vunpack.c.l.b16 %v119
    %v1321 = vunpack.c.l.b16 %v120
    %v1322 = vunpack.c.h.b16 %v120
    %v1323 = vunpack.c.l.b16 %v121
    %v1324 = vunpack.c.l.b16 %v122
    %v1325 = vunpack.c.h.b16 %v122
    %v1326 = vunpack.c.l.b16 %v123
    %v1327 = vunpack.c.l.b16 %v124
    %v1328 = vunpack.c.h.b16 %v124
    %v1329 = vunpack.c.l.b16 %v125
    %v1330 = vunpack.c.l.b16 %v126
    %v1331 = vunpack.c.h.b16 %v126
    %v1332 = vunpack.c.l.b16 %v127
    %v1333 = vunpack.c.l.b16 %v128
    %v1334 = vunpack.c.h.b16 %v128
    %v1335 = vunpack.c.l.b16 %v129
    %v1336 = vunpack.c.l.b16 %v130
    %v1337 = vunpack.c.h.b16 %v130
    %v1338 = vunpack.c.l.b16 %v131
    %v1339 = vunpack.c.l.b16 %v132
    %v1340 = vunpack.c.h.b16 %v132
    %v1341 = vunpack.c.l.b16 %v133
    %v1342 = vunpack.c.l.b16 %v134
    %v1343 = vunpack.c.h.b16 %v134
    %v1344 = vunpack.c.l.b16 %v135
    %v1345 = vunpack.c.l.b16 %v136
    %v1346 = vunpack.c.h.b16 %v136
    %v1347 = vunpack.c.l.b16 %v137
    %v1348 = vunpack.c.l.b16 %v138
    %v1349 = vunpack.c.h.b16 %v138
    %v1350 = vunpack.c.l.b16 %v139
    %v1351 = vunpack.c.l.b16 %v140
    %v1352 = vunpack.c.h.b16 %v140
    %v1353 = vunpack.c.l.b16 %v141
    %v1354 = vunpack.c.l.b16 %v142
    %v1355 = vunpack.c.h.b16 %v142
    %v1356 = vunpack.c.l.b16 %v143
    %v1357 = vunpack.c.l.b16 %v144
    %v1358 = vunpack.c.h.b16 %v144
    %v1359 = vunpack.c.l.b16 %v145
    %v1360 = vpack.c.b16 %v1219, %v1216
    %v1361 = vpack.c.b16 %v1220, %v1217
    %v1362 = vpack.c.b16 %v1221, %v1218
    %v1363 = vpack.c.b16 %v1225, %v1222
    %v1364 = vpack.c.b16 %v1226, %v1223
    %v1365 = vpack.c.b16 %v1227, %v1224
    %v1366 = vpack.c.b16 %v1231, %v1228
    %v1367 = vpack.c.b16 %v1232, %v1229
    %v1368 = vpack.c.b16 %v1233, %v1230
    %v1369 = vpack.c.b16 %v1237, %v1234
    %v1370 = vpack.c.b16 %v1238, %v1235
    %v1371 = vpack.c.b16 %v1239, %v1236
    %v1372 = vpack.c.b16 %v1243, %v1240
    %v1373 = vpack.c.b16 %v1244, %v1241
    %v1374 = vpack.c.b16 %v1245, %v1242
    %v1375 = vpack.c.b16 %v1249, %v1246
    %v1376 = vpack.c.b16 %v1250, %v1247
    %v1377 = vpack.c.b16 %v1251, %v1248
    %v1378 = vpack.c.b16 %v1255, %v1252
    %v1379 = vpack.c.b16 %v1256, %v1253
    %v1380 = vpack.c.b16 %v1257, %v1254
    %v1381 = vpack.c.b16 %v1261, %v1258
    %v1382 = vpack.c.b16 %v1262, %v1259
    %v1383 = vpack.c.b16 %v1263, %v1260
    %v1384 = vpack.c.b16 %v1267, %v1264
    %v1385 = vpack.c.b16 %v1268, %v1265
    %v1386 = vpack.c.b16 %v1269, %v1266
    %v1387 = vpack.c.b16 %v1273, %v1270
    %v1388 = vpack.c.b16 %v1274, %v1271
    %v1389 = vpack.c.b16 %v1275, %v1272
    %v1390 = vpack.c.b16 %v1279, %v1276
    %v1391 = vpack.c.b16 %v1280, %v1277
    %v1392 = vpack.c.b16 %v1281, %v1278
    %v1393 = vpack.c.b16 %v1285, %v1282
    %v1394 = vpack.c.b16 %v1286, %v1283
    %v1395 = vpack.c.b16 %v1287, %v1284
    %v1396 = vpack.c.b16 %v1291, %v1288
    %v1397 = vpack.c.b16 %v1292, %v1289
    %v1398 = vpack.c.b16 %v1293, %v1290
    %v1399 = vpack.c.b16 %v1297, %v1294
    %v1400 = vpack.c.b16 %v1298, %v1295
    %v1401 = vpack.c.b16 %v1299, %v1296
    %v1402 = vpack.c.b16 %v1303, %v1300
    %v1403 = vpack.c.b16 %v1304, %v1301
    %v1404 = vpack.c.b16 %v1305, %v1302
    %v1405 = vpack.c.b16 %v1309, %v1306
    %v1406 = vpack.c.b16 %v1310, %v1307
    %v1407 = vpack.c.b16 %v1311, %v1308
    %v1408 = vpack.c.b16 %v1315, %v1312
    %v1409 = vpack.c.b16 %v1316, %v1313
    %v1410 = vpack.c.b16 %v1317, %v1314
    %v1411 = vpack.c.b16 %v1321, %v1318
    %v1412 = vpack.c.b16 %v1322, %v1319
    %v1413 = vpack.c.b16 %v1323, %v1320
    %v1414 = vpack.c.b16 %v1327, %v1324
    %v1415 = vpack.c.b16 %v1328, %v1325
    %v1416 = vpack.c.b16 %v1329, %v1326
    %v1417 = vpack.c.b16 %v1333, %v1330
    %v1418 = vpack.c.b16 %v1334, %v1331
    %v1419 = vpack.c.b16 %v1335, %v1332
    %v1420 = vpack.c.b16 %v1339, %v1336
    %v1421 = vpack.c.b16 %v1340, %v1337
    %v1422 = vpack.c.b16 %v1341, %v1338
    %v1423 = vpack.c.b16 %v1345, %v1342
    %v1424 = vpack.c.b16 %v1346, %v1343
    %v1425 = vpack.c.b16 %v1347, %v1344
    %v1426 = vpack.c.b16 %v1351, %v1348
    %v1427 = vpack.c.b16 %v1352, %v1349
    %v1428 = vpack.c.b16 %v1353, %v1350
    %v1429 = vpack.c.b16 %v1357, %v1354
    %v1430 = vpack.c.b16 %v1358, %v1355
    %v1431 = vpack.c.b16 %v1359, %v1356
    %1504 = vmatpush.bf16.msra.mxu0 %v1100
    %1505 = vmatpush.bf16.msra.mxu0 %v1099
    %1506 = vmatpush.bf16.msra.mxu0 %v1098
    %1507 = vmatpush.bf16.msra.mxu0 %v1097
    %1508 = vmatpush.bf16.msra.mxu0 %v1096
    %1509 = vmatpush.bf16.msra.mxu0 %v1095
    %1510 = vmatpush.bf16.msra.mxu0 %v1094
    %1511 = vmatpush.bf16.msra.mxu0 %v1093
    %1512 = vmatmul.bf16.gmra.mxu0 %v1360
    %v1513 = vpop.f32.mrf.mxu0
    %v1514 = vadd.f32 %v1118, %v1513
    %v1515 = vpop.f32.mrf.mxu0
    %v1516 = vadd.f32 %v1118, %v1515
    %1517 = vmatmul.bf16.gmra.mxu0 %v1363
    %v1518 = vpop.f32.mrf.mxu0
    %v1519 = vadd.f32 %v1118, %v1518
    %v1520 = vpop.f32.mrf.mxu0
    %v1521 = vadd.f32 %v1118, %v1520
    %1522 = vmatmul.bf16.gmra.mxu0 %v1366
    %v1523 = vpop.f32.mrf.mxu0
    %v1524 = vadd.f32 %v1118, %v1523
    %v1525 = vpop.f32.mrf.mxu0
    %v1526 = vadd.f32 %v1118, %v1525
    %1527 = vmatmul.bf16.gmra.mxu0 %v1369
    %v1528 = vpop.f32.mrf.mxu0
    %v1529 = vadd.f32 %v1118, %v1528
    %v1530 = vpop.f32.mrf.mxu0
    %v1531 = vadd.f32 %v1118, %v1530
    %1532 = vmatmul.bf16.gmra.mxu0 %v1372
    %v1533 = vpop.f32.mrf.mxu0
    %v1534 = vadd.f32 %v1118, %v1533
    %v1535 = vpop.f32.mrf.mxu0
    %v1536 = vadd.f32 %v1118, %v1535
    %1537 = vmatmul.bf16.gmra.mxu0 %v1375
    %v1538 = vpop.f32.mrf.mxu0
    %v1539 = vadd.f32 %v1118, %v1538
    %v1540 = vpop.f32.mrf.mxu0
    %v1541 = vadd.f32 %v1118, %v1540
    %1542 = vmatmul.bf16.gmra.mxu0 %v1378
    %v1543 = vpop.f32.mrf.mxu0
    %v1544 = vadd.f32 %v1118, %v1543
    %v1545 = vpop.f32.mrf.mxu0
    %v1546 = vadd.f32 %v1118, %v1545
    %1547 = vmatmul.bf16.gmra.mxu0 %v1381
    %v1548 = vpop.f32.mrf.mxu0
    %v1549 = vadd.f32 %v1118, %v1548
    %v1550 = vpop.f32.mrf.mxu0
    %v1551 = vadd.f32 %v1118, %v1550
    %1552 = vmatmul.bf16.gmra.mxu0 %v1384
    %v1553 = vpop.f32.mrf.mxu0
    %v1554 = vadd.f32 %v1118, %v1553
    %v1555 = vpop.f32.mrf.mxu0
    %v1556 = vadd.f32 %v1118, %v1555
    %1557 = vmatmul.bf16.gmra.mxu0 %v1387
    %v1558 = vpop.f32.mrf.mxu0
    %v1559 = vadd.f32 %v1118, %v1558
    %v1560 = vpop.f32.mrf.mxu0
    %v1561 = vadd.f32 %v1118, %v1560
    %1562 = vmatmul.bf16.gmra.mxu0 %v1390
    %v1563 = vpop.f32.mrf.mxu0
    %v1564 = vadd.f32 %v1118, %v1563
    %v1565 = vpop.f32.mrf.mxu0
    %v1566 = vadd.f32 %v1118, %v1565
    %1567 = vmatmul.bf16.gmra.mxu0 %v1393
    %v1568 = vpop.f32.mrf.mxu0
    %v1569 = vadd.f32 %v1118, %v1568
    %v1570 = vpop.f32.mrf.mxu0
    %v1571 = vadd.f32 %v1118, %v1570
    %1572 = vmatmul.bf16.gmra.mxu0 %v1396
    %v1573 = vpop.f32.mrf.mxu0
    %v1574 = vadd.f32 %v1118, %v1573
    %v1575 = vpop.f32.mrf.mxu0
    %v1576 = vadd.f32 %v1118, %v1575
    %1577 = vmatmul.bf16.gmra.mxu0 %v1399
    %v1578 = vpop.f32.mrf.mxu0
    %v1579 = vadd.f32 %v1118, %v1578
    %v1580 = vpop.f32.mrf.mxu0
    %v1581 = vadd.f32 %v1118, %v1580
    %1582 = vmatmul.bf16.gmra.mxu0 %v1402
    %v1583 = vpop.f32.mrf.mxu0
    %v1584 = vadd.f32 %v1118, %v1583
    %v1585 = vpop.f32.mrf.mxu0
    %v1586 = vadd.f32 %v1118, %v1585
    %1587 = vmatmul.bf16.gmra.mxu0 %v1405
    %v1588 = vpop.f32.mrf.mxu0
    %v1589 = vadd.f32 %v1118, %v1588
    %v1590 = vpop.f32.mrf.mxu0
    %v1591 = vadd.f32 %v1118, %v1590
    %1592 = vmatmul.bf16.gmra.mxu0 %v1408
    %v1593 = vpop.f32.mrf.mxu0
    %v1594 = vadd.f32 %v1118, %v1593
    %v1595 = vpop.f32.mrf.mxu0
    %v1596 = vadd.f32 %v1118, %v1595
    %1597 = vmatmul.bf16.gmra.mxu0 %v1411
    %v1598 = vpop.f32.mrf.mxu0
    %v1599 = vadd.f32 %v1118, %v1598
    %v1600 = vpop.f32.mrf.mxu0
    %v1601 = vadd.f32 %v1118, %v1600
    %1602 = vmatmul.bf16.gmra.mxu0 %v1414
    %v1603 = vpop.f32.mrf.mxu0
    %v1604 = vadd.f32 %v1118, %v1603
    %v1605 = vpop.f32.mrf.mxu0
    %v1606 = vadd.f32 %v1118, %v1605
    %1607 = vmatmul.bf16.gmra.mxu0 %v1417
    %v1608 = vpop.f32.mrf.mxu0
    %v1609 = vadd.f32 %v1118, %v1608
    %v1610 = vpop.f32.mrf.mxu0
    %v1611 = vadd.f32 %v1118, %v1610
    %1612 = vmatmul.bf16.gmra.mxu0 %v1420
    %v1613 = vpop.f32.mrf.mxu0
    %v1614 = vadd.f32 %v1118, %v1613
    %v1615 = vpop.f32.mrf.mxu0
    %v1616 = vadd.f32 %v1118, %v1615
    %1617 = vmatmul.bf16.gmra.mxu0 %v1423
    %v1618 = vpop.f32.mrf.mxu0
    %v1619 = vadd.f32 %v1118, %v1618
    %v1620 = vpop.f32.mrf.mxu0
    %v1621 = vadd.f32 %v1118, %v1620
    %1622 = vmatmul.bf16.gmra.mxu0 %v1426
    %v1623 = vpop.f32.mrf.mxu0
    %v1624 = vadd.f32 %v1118, %v1623
    %v1625 = vpop.f32.mrf.mxu0
    %v1626 = vadd.f32 %v1118, %v1625
    %1627 = vmatmul.bf16.gmra.mxu0 %v1429
    %v1628 = vpop.f32.mrf.mxu0
    %v1629 = vadd.f32 %v1118, %v1628
    %v1630 = vpop.f32.mrf.mxu0
    %v1631 = vadd.f32 %v1118, %v1630
    %1632 = vdwg.mxu0
    %1633 = vmatpush.bf16.msra.mxu0 %v1108
    %1634 = vmatpush.bf16.msra.mxu0 %v1107
    %1635 = vmatpush.bf16.msra.mxu0 %v1106
    %1636 = vmatpush.bf16.msra.mxu0 %v1105
    %1637 = vmatpush.bf16.msra.mxu0 %v1104
    %1638 = vmatpush.bf16.msra.mxu0 %v1103
    %1639 = vmatpush.bf16.msra.mxu0 %v1102
    %1640 = vmatpush.bf16.msra.mxu0 %v1101
    %1641 = vmatmul.bf16.gmra.mxu0 %v1361
    %v1642 = vpop.f32.mrf.mxu0
    %v1643 = vadd.f32 %v1514, %v1642
    %v1644 = vpop.f32.mrf.mxu0
    %v1645 = vadd.f32 %v1516, %v1644
    %1646 = vmatmul.bf16.gmra.mxu0 %v1364
    %v1647 = vpop.f32.mrf.mxu0
    %v1648 = vadd.f32 %v1519, %v1647
    %v1649 = vpop.f32.mrf.mxu0
    %v1650 = vadd.f32 %v1521, %v1649
    %1651 = vmatmul.bf16.gmra.mxu0 %v1367
    %v1652 = vpop.f32.mrf.mxu0
    %v1653 = vadd.f32 %v1524, %v1652
    %v1654 = vpop.f32.mrf.mxu0
    %v1655 = vadd.f32 %v1526, %v1654
    %1656 = vmatmul.bf16.gmra.mxu0 %v1370
    %v1657 = vpop.f32.mrf.mxu0
    %v1658 = vadd.f32 %v1529, %v1657
    %v1659 = vpop.f32.mrf.mxu0
    %v1660 = vadd.f32 %v1531, %v1659
    %1661 = vmatmul.bf16.gmra.mxu0 %v1373
    %v1662 = vpop.f32.mrf.mxu0
    %v1663 = vadd.f32 %v1534, %v1662
    %v1664 = vpop.f32.mrf.mxu0
    %v1665 = vadd.f32 %v1536, %v1664
    %1666 = vmatmul.bf16.gmra.mxu0 %v1376
    %v1667 = vpop.f32.mrf.mxu0
    %v1668 = vadd.f32 %v1539, %v1667
    %v1669 = vpop.f32.mrf.mxu0
    %v1670 = vadd.f32 %v1541, %v1669
    %1671 = vmatmul.bf16.gmra.mxu0 %v1379
    %v1672 = vpop.f32.mrf.mxu0
    %v1673 = vadd.f32 %v1544, %v1672
    %v1674 = vpop.f32.mrf.mxu0
    %v1675 = vadd.f32 %v1546, %v1674
    %1676 = vmatmul.bf16.gmra.mxu0 %v1382
    %v1677 = vpop.f32.mrf.mxu0
    %v1678 = vadd.f32 %v1549, %v1677
    %v1679 = vpop.f32.mrf.mxu0
    %v1680 = vadd.f32 %v1551, %v1679
    %1681 = vmatmul.bf16.gmra.mxu0 %v1385
    %v1682 = vpop.f32.mrf.mxu0
    %v1683 = vadd.f32 %v1554, %v1682
    %v1684 = vpop.f32.mrf.mxu0
    %v1685 = vadd.f32 %v1556, %v1684
    %1686 = vmatmul.bf16.gmra.mxu0 %v1388
    %v1687 = vpop.f32.mrf.mxu0
    %v1688 = vadd.f32 %v1559, %v1687
    %v1689 = vpop.f32.mrf.mxu0
    %v1690 = vadd.f32 %v1561, %v1689
    %1691 = vmatmul.bf16.gmra.mxu0 %v1391
    %v1692 = vpop.f32.mrf.mxu0
    %v1693 = vadd.f32 %v1564, %v1692
    %v1694 = vpop.f32.mrf.mxu0
    %v1695 = vadd.f32 %v1566, %v1694
    %1696 = vmatmul.bf16.gmra.mxu0 %v1394
    %v1697 = vpop.f32.mrf.mxu0
    %v1698 = vadd.f32 %v1569, %v1697
    %v1699 = vpop.f32.mrf.mxu0
    %v1700 = vadd.f32 %v1571, %v1699
    %1701 = vmatmul.bf16.gmra.mxu0 %v1397
    %v1702 = vpop.f32.mrf.mxu0
    %v1703 = vadd.f32 %v1574, %v1702
    %v1704 = vpop.f32.mrf.mxu0
    %v1705 = vadd.f32 %v1576, %v1704
    %1706 = vmatmul.bf16.gmra.mxu0 %v1400
    %v1707 = vpop.f32.mrf.mxu0
    %v1708 = vadd.f32 %v1579, %v1707
    %v1709 = vpop.f32.mrf.mxu0
    %v1710 = vadd.f32 %v1581, %v1709
    %1711 = vmatmul.bf16.gmra.mxu0 %v1403
    %v1712 = vpop.f32.mrf.mxu0
    %v1713 = vadd.f32 %v1584, %v1712
    %v1714 = vpop.f32.mrf.mxu0
    %v1715 = vadd.f32 %v1586, %v1714
    %1716 = vmatmul.bf16.gmra.mxu0 %v1406
    %v1717 = vpop.f32.mrf.mxu0
    %v1718 = vadd.f32 %v1589, %v1717
    %v1719 = vpop.f32.mrf.mxu0
    %v1720 = vadd.f32 %v1591, %v1719
    %1721 = vmatmul.bf16.gmra.mxu0 %v1409
    %v1722 = vpop.f32.mrf.mxu0
    %v1723 = vadd.f32 %v1594, %v1722
    %v1724 = vpop.f32.mrf.mxu0
    %v1725 = vadd.f32 %v1596, %v1724
    %1726 = vmatmul.bf16.gmra.mxu0 %v1412
    %v1727 = vpop.f32.mrf.mxu0
    %v1728 = vadd.f32 %v1599, %v1727
    %v1729 = vpop.f32.mrf.mxu0
    %v1730 = vadd.f32 %v1601, %v1729
    %1731 = vmatmul.bf16.gmra.mxu0 %v1415
    %v1732 = vpop.f32.mrf.mxu0
    %v1733 = vadd.f32 %v1604, %v1732
    %v1734 = vpop.f32.mrf.mxu0
    %v1735 = vadd.f32 %v1606, %v1734
    %1736 = vmatmul.bf16.gmra.mxu0 %v1418
    %v1737 = vpop.f32.mrf.mxu0
    %v1738 = vadd.f32 %v1609, %v1737
    %v1739 = vpop.f32.mrf.mxu0
    %v1740 = vadd.f32 %v1611, %v1739
    %1741 = vmatmul.bf16.gmra.mxu0 %v1421
    %v1742 = vpop.f32.mrf.mxu0
    %v1743 = vadd.f32 %v1614, %v1742
    %v1744 = vpop.f32.mrf.mxu0
    %v1745 = vadd.f32 %v1616, %v1744
    %1746 = vmatmul.bf16.gmra.mxu0 %v1424
    %v1747 = vpop.f32.mrf.mxu0
    %v1748 = vadd.f32 %v1619, %v1747
    %v1749 = vpop.f32.mrf.mxu0
    %v1750 = vadd.f32 %v1621, %v1749
    %1751 = vmatmul.bf16.gmra.mxu0 %v1427
    %v1752 = vpop.f32.mrf.mxu0
    %v1753 = vadd.f32 %v1624, %v1752
    %v1754 = vpop.f32.mrf.mxu0
    %v1755 = vadd.f32 %v1626, %v1754
    %1756 = vmatmul.bf16.gmra.mxu0 %v1430
    %v1757 = vpop.f32.mrf.mxu0
    %v1758 = vadd.f32 %v1629, %v1757
    %v1759 = vpop.f32.mrf.mxu0
    %v1760 = vadd.f32 %v1631, %v1759
    %1761 = vdwg.mxu0
    %1762 = vmatpush.bf16.msra.mxu0 %v1116
    %1763 = vmatpush.bf16.msra.mxu0 %v1115
    %1764 = vmatpush.bf16.msra.mxu0 %v1114
    %1765 = vmatpush.bf16.msra.mxu0 %v1113
    %1766 = vmatpush.bf16.msra.mxu0 %v1112
    %1767 = vmatpush.bf16.msra.mxu0 %v1111
    %1768 = vmatpush.bf16.msra.mxu0 %v1110
    %1769 = vmatpush.bf16.msra.mxu0 %v1109
    %1770 = vmatmul.bf16.gmra.mxu0 %v1362
    %v1771 = vpop.f32.mrf.mxu0
    %v1772 = vadd.f32 %v1643, %v1771
    %v1773 = vpop.f32.mrf.mxu0
    %v1774 = vadd.f32 %v1645, %v1773
    %1775 = vmatmul.bf16.gmra.mxu0 %v1365
    %v1776 = vpop.f32.mrf.mxu0
    %v1777 = vadd.f32 %v1648, %v1776
    %v1778 = vpop.f32.mrf.mxu0
    %v1779 = vadd.f32 %v1650, %v1778
    %1780 = vmatmul.bf16.gmra.mxu0 %v1368
    %v1781 = vpop.f32.mrf.mxu0
    %v1782 = vadd.f32 %v1653, %v1781
    %v1783 = vpop.f32.mrf.mxu0
    %v1784 = vadd.f32 %v1655, %v1783
    %1785 = vmatmul.bf16.gmra.mxu0 %v1371
    %v1786 = vpop.f32.mrf.mxu0
    %v1787 = vadd.f32 %v1658, %v1786
    %v1788 = vpop.f32.mrf.mxu0
    %v1789 = vadd.f32 %v1660, %v1788
    %1790 = vmatmul.bf16.gmra.mxu0 %v1374
    %v1791 = vpop.f32.mrf.mxu0
    %v1792 = vadd.f32 %v1663, %v1791
    %v1793 = vpop.f32.mrf.mxu0
    %v1794 = vadd.f32 %v1665, %v1793
    %1795 = vmatmul.bf16.gmra.mxu0 %v1377
    %v1796 = vpop.f32.mrf.mxu0
    %v1797 = vadd.f32 %v1668, %v1796
    %v1798 = vpop.f32.mrf.mxu0
    %v1799 = vadd.f32 %v1670, %v1798
    %1800 = vmatmul.bf16.gmra.mxu0 %v1380
    %v1801 = vpop.f32.mrf.mxu0
    %v1802 = vadd.f32 %v1673, %v1801
    %v1803 = vpop.f32.mrf.mxu0
    %v1804 = vadd.f32 %v1675, %v1803
    %1805 = vmatmul.bf16.gmra.mxu0 %v1383
    %v1806 = vpop.f32.mrf.mxu0
    %v1807 = vadd.f32 %v1678, %v1806
    %v1808 = vpop.f32.mrf.mxu0
    %v1809 = vadd.f32 %v1680, %v1808
    %1810 = vmatmul.bf16.gmra.mxu0 %v1386
    %v1811 = vpop.f32.mrf.mxu0
    %v1812 = vadd.f32 %v1683, %v1811
    %v1813 = vpop.f32.mrf.mxu0
    %v1814 = vadd.f32 %v1685, %v1813
    %1815 = vmatmul.bf16.gmra.mxu0 %v1389
    %v1816 = vpop.f32.mrf.mxu0
    %v1817 = vadd.f32 %v1688, %v1816
    %v1818 = vpop.f32.mrf.mxu0
    %v1819 = vadd.f32 %v1690, %v1818
    %1820 = vmatmul.bf16.gmra.mxu0 %v1392
    %v1821 = vpop.f32.mrf.mxu0
    %v1822 = vadd.f32 %v1693, %v1821
    %v1823 = vpop.f32.mrf.mxu0
    %v1824 = vadd.f32 %v1695, %v1823
    %1825 = vmatmul.bf16.gmra.mxu0 %v1395
    %v1826 = vpop.f32.mrf.mxu0
    %v1827 = vadd.f32 %v1698, %v1826
    %v1828 = vpop.f32.mrf.mxu0
    %v1829 = vadd.f32 %v1700, %v1828
    %1830 = vmatmul.bf16.gmra.mxu0 %v1398
    %v1831 = vpop.f32.mrf.mxu0
    %v1832 = vadd.f32 %v1703, %v1831
    %v1833 = vpop.f32.mrf.mxu0
    %v1834 = vadd.f32 %v1705, %v1833
    %1835 = vmatmul.bf16.gmra.mxu0 %v1401
    %v1836 = vpop.f32.mrf.mxu0
    %v1837 = vadd.f32 %v1708, %v1836
    %v1838 = vpop.f32.mrf.mxu0
    %v1839 = vadd.f32 %v1710, %v1838
    %1840 = vmatmul.bf16.gmra.mxu0 %v1404
    %v1841 = vpop.f32.mrf.mxu0
    %v1842 = vadd.f32 %v1713, %v1841
    %v1843 = vpop.f32.mrf.mxu0
    %v1844 = vadd.f32 %v1715, %v1843
    %1845 = vmatmul.bf16.gmra.mxu0 %v1407
    %v1846 = vpop.f32.mrf.mxu0
    %v1847 = vadd.f32 %v1718, %v1846
    %v1848 = vpop.f32.mrf.mxu0
    %v1849 = vadd.f32 %v1720, %v1848
    %1850 = vmatmul.bf16.gmra.mxu0 %v1410
    %v1851 = vpop.f32.mrf.mxu0
    %v1852 = vadd.f32 %v1723, %v1851
    %v1853 = vpop.f32.mrf.mxu0
    %v1854 = vadd.f32 %v1725, %v1853
    %1855 = vmatmul.bf16.gmra.mxu0 %v1413
    %v1856 = vpop.f32.mrf.mxu0
    %v1857 = vadd.f32 %v1728, %v1856
    %v1858 = vpop.f32.mrf.mxu0
    %v1859 = vadd.f32 %v1730, %v1858
    %1860 = vmatmul.bf16.gmra.mxu0 %v1416
    %v1861 = vpop.f32.mrf.mxu0
    %v1862 = vadd.f32 %v1733, %v1861
    %v1863 = vpop.f32.mrf.mxu0
    %v1864 = vadd.f32 %v1735, %v1863
    %1865 = vmatmul.bf16.gmra.mxu0 %v1419
    %v1866 = vpop.f32.mrf.mxu0
    %v1867 = vadd.f32 %v1738, %v1866
    %v1868 = vpop.f32.mrf.mxu0
    %v1869 = vadd.f32 %v1740, %v1868
    %1870 = vmatmul.bf16.gmra.mxu0 %v1422
    %v1871 = vpop.f32.mrf.mxu0
    %v1872 = vadd.f32 %v1743, %v1871
    %v1873 = vpop.f32.mrf.mxu0
    %v1874 = vadd.f32 %v1745, %v1873
    %1875 = vmatmul.bf16.gmra.mxu0 %v1425
    %v1876 = vpop.f32.mrf.mxu0
    %v1877 = vadd.f32 %v1748, %v1876
    %v1878 = vpop.f32.mrf.mxu0
    %v1879 = vadd.f32 %v1750, %v1878
    %1880 = vmatmul.bf16.gmra.mxu0 %v1428
    %v1881 = vpop.f32.mrf.mxu0
    %v1882 = vadd.f32 %v1753, %v1881
    %v1883 = vpop.f32.mrf.mxu0
    %v1884 = vadd.f32 %v1755, %v1883
    %1885 = vmatmul.bf16.gmra.mxu0 %v1431
    %v1886 = vpop.f32.mrf.mxu0
    %v1887 = vadd.f32 %v1758, %v1886
    %v1888 = vpop.f32.mrf.mxu0
    %v1889 = vadd.f32 %v1760, %v1888
    %1890 = vdwg.mxu0
    %v1891 = vmax.f32 %v1772, 0.0
    %v1892 = vmax.f32 %v1774, 0.0
    %v1893 = vmax.f32 %v1777, 0.0
    %v1894 = vmax.f32 %v1779, 0.0
    %v1895 = vmax.f32 %v1782, 0.0
    %v1896 = vmax.f32 %v1784, 0.0
    %v1897 = vmax.f32 %v1787, 0.0
    %v1898 = vmax.f32 %v1789, 0.0
    %v1899 = vmax.f32 %v1792, 0.0
    %v1900 = vmax.f32 %v1794, 0.0
    %v1901 = vmax.f32 %v1797, 0.0
    %v1902 = vmax.f32 %v1799, 0.0
    %v1903 = vmax.f32 %v1802, 0.0
    %v1904 = vmax.f32 %v1804, 0.0
    %v1905 = vmax.f32 %v1807, 0.0
    %v1906 = vmax.f32 %v1809, 0.0
    %v1907 = vmax.f32 %v1812, 0.0
    %v1908 = vmax.f32 %v1814, 0.0
    %v1909 = vmax.f32 %v1817, 0.0
    %v1910 = vmax.f32 %v1819, 0.0
    %v1911 = vmax.f32 %v1822, 0.0
    %v1912 = vmax.f32 %v1824, 0.0
    %v1913 = vmax.f32 %v1827, 0.0
    %v1914 = vmax.f32 %v1829, 0.0
    %v1915 = vmax.f32 %v1832, 0.0
    %v1916 = vmax.f32 %v1834, 0.0
    %v1917 = vmax.f32 %v1837, 0.0
    %v1918 = vmax.f32 %v1839, 0.0
    %v1919 = vmax.f32 %v1842, 0.0
    %v1920 = vmax.f32 %v1844, 0.0
    %v1921 = vmax.f32 %v1847, 0.0
    %v1922 = vmax.f32 %v1849, 0.0
    %v1923 = vmax.f32 %v1852, 0.0
    %v1924 = vmax.f32 %v1854, 0.0
    %v1925 = vmax.f32 %v1857, 0.0
    %v1926 = vmax.f32 %v1859, 0.0
    %v1927 = vmax.f32 %v1862, 0.0
    %v1928 = vmax.f32 %v1864, 0.0
    %v1929 = vmax.f32 %v1867, 0.0
    %v1930 = vmax.f32 %v1869, 0.0
    %v1931 = vmax.f32 %v1872, 0.0
    %v1932 = vmax.f32 %v1874, 0.0
    %v1933 = vmax.f32 %v1877, 0.0
    %v1934 = vmax.f32 %v1879, 0.0
    %v1935 = vmax.f32 %v1882, 0.0
    %v1936 = vmax.f32 %v1884, 0.0
    %v1937 = vmax.f32 %v1887, 0.0
    %v1938 = vmax.f32 %v1889, 0.0
    %v1939 = vpack.c.bf16 %v1892, %v1891
    %v1940 = vpack.c.bf16 %v1894, %v1893
    %v1941 = vpack.c.bf16 %v1896, %v1895
    %v1942 = vpack.c.bf16 %v1898, %v1897
    %v1943 = vpack.c.bf16 %v1900, %v1899
    %v1944 = vpack.c.bf16 %v1902, %v1901
    %v1945 = vpack.c.bf16 %v1904, %v1903
    %v1946 = vpack.c.bf16 %v1906, %v1905
    %v1947 = vpack.c.bf16 %v1908, %v1907
    %v1948 = vpack.c.bf16 %v1910, %v1909
    %v1949 = vpack.c.bf16 %v1912, %v1911
    %v1950 = vpack.c.bf16 %v1914, %v1913
    %v1951 = vpack.c.bf16 %v1916, %v1915
    %v1952 = vpack.c.bf16 %v1918, %v1917
    %v1953 = vpack.c.bf16 %v1920, %v1919
    %v1954 = vpack.c.bf16 %v1922, %v1921
    %v1955 = vpack.c.bf16 %v1924, %v1923
    %v1956 = vpack.c.bf16 %v1926, %v1925
    %v1957 = vpack.c.bf16 %v1928, %v1927
    %v1958 = vpack.c.bf16 %v1930, %v1929
    %v1959 = vpack.c.bf16 %v1932, %v1931
    %v1960 = vpack.c.bf16 %v1934, %v1933
    %v1961 = vpack.c.bf16 %v1936, %v1935
    %v1962 = vpack.c.bf16 %v1938, %v1937
    %v1971 = vunpack.c.l.b16 %v152
    %v1972 = vunpack.c.l.b16 %v153
    %v1973 = vunpack.c.l.b16 %v154
    %v1974 = vunpack.c.l.b16 %v155
    %v1975 = vunpack.c.l.b16 %v156
    %v1976 = vunpack.c.l.b16 %v157
    %v1977 = vunpack.c.l.b16 %v158
    %v1978 = vunpack.c.l.b16 %v159
    %v1979 = vpack.c.b16 %v1972, %v1971
    %v1980 = vpack.c.b16 %v1974, %v1973
    %v1981 = vpack.c.b16 %v1976, %v1975
    %v1982 = vpack.c.b16 %v1978, %v1977
    %vm1987 = vcmask 523264
    %v1989 = vsel %vm1987, %v1939, 0
    %v1992 = vsel %vm1987, %v1940, 0
    %v1995 = vsel %vm1987, %v1941, 0
    %v1998 = vsel %vm1987, %v1942, 0
    %v2001 = vsel %vm1987, %v1943, 0
    %v2004 = vsel %vm1987, %v1944, 0
    %v2007 = vsel %vm1987, %v1945, 0
    %v2010 = vsel %vm1987, %v1946, 0
    %v2013 = vsel %vm1987, %v1947, 0
    %v2016 = vsel %vm1987, %v1948, 0
    %v2019 = vsel %vm1987, %v1949, 0
    %v2022 = vsel %vm1987, %v1950, 0
    %v2025 = vsel %vm1987, %v1951, 0
    %v2028 = vsel %vm1987, %v1952, 0
    %v2031 = vsel %vm1987, %v1953, 0
    %v2034 = vsel %vm1987, %v1954, 0
    %v2037 = vsel %vm1987, %v1955, 0
    %v2040 = vsel %vm1987, %v1956, 0
    %v2043 = vsel %vm1987, %v1957, 0
    %v2046 = vsel %vm1987, %v1958, 0
    %v2049 = vsel %vm1987, %v1959, 0
    %v2052 = vsel %vm1987, %v1960, 0
    %v2055 = vsel %vm1987, %v1961, 0
    %v2058 = vsel %vm1987, %v1962, 0
    %2060 = vmatpush.bf16.msra.mxu0 0
    %2061 = vmatpush.bf16.msra.mxu0 0
    %2062 = vmatpush.bf16.msra.mxu0 0
    %2063 = vmatpush.bf16.msra.mxu0 0
    %2064 = vmatpush.bf16.msra.mxu0 %v1982
    %2065 = vmatpush.bf16.msra.mxu0 %v1981
    %2066 = vmatpush.bf16.msra.mxu0 %v1980
    %2067 = vmatpush.bf16.msra.mxu0 %v1979
    %2068 = vmatmul.bf16.gmra.mxu0 %v1989
    %v2069 = vpop.f32.mrf.mxu0
    %v2070 = vadd.f32 0.0, %v2069
    %v2071 = vpop.f32.mrf.mxu0
    %v2072 = vadd.f32 0.0, %v2071
    %2073 = vmatmul.bf16.gmra.mxu0 %v1992
    %v2074 = vpop.f32.mrf.mxu0
    %v2075 = vadd.f32 0.0, %v2074
    %v2076 = vpop.f32.mrf.mxu0
    %v2077 = vadd.f32 0.0, %v2076
    %2078 = vmatmul.bf16.gmra.mxu0 %v1995
    %v2079 = vpop.f32.mrf.mxu0
    %v2080 = vadd.f32 0.0, %v2079
    %v2081 = vpop.f32.mrf.mxu0
    %v2082 = vadd.f32 0.0, %v2081
    %2083 = vmatmul.bf16.gmra.mxu0 %v1998
    %v2084 = vpop.f32.mrf.mxu0
    %v2085 = vadd.f32 0.0, %v2084
    %v2086 = vpop.f32.mrf.mxu0
    %v2087 = vadd.f32 0.0, %v2086
    %2088 = vmatmul.bf16.gmra.mxu0 %v2001
    %v2089 = vpop.f32.mrf.mxu0
    %v2090 = vadd.f32 0.0, %v2089
    %v2091 = vpop.f32.mrf.mxu0
    %v2092 = vadd.f32 0.0, %v2091
    %2093 = vmatmul.bf16.gmra.mxu0 %v2004
    %v2094 = vpop.f32.mrf.mxu0
    %v2095 = vadd.f32 0.0, %v2094
    %v2096 = vpop.f32.mrf.mxu0
    %v2097 = vadd.f32 0.0, %v2096
    %2098 = vmatmul.bf16.gmra.mxu0 %v2007
    %v2099 = vpop.f32.mrf.mxu0
    %v2100 = vadd.f32 0.0, %v2099
    %v2101 = vpop.f32.mrf.mxu0
    %v2102 = vadd.f32 0.0, %v2101
    %2103 = vmatmul.bf16.gmra.mxu0 %v2010
    %v2104 = vpop.f32.mrf.mxu0
    %v2105 = vadd.f32 0.0, %v2104
    %v2106 = vpop.f32.mrf.mxu0
    %v2107 = vadd.f32 0.0, %v2106
    %2108 = vmatmul.bf16.gmra.mxu0 %v2013
    %v2109 = vpop.f32.mrf.mxu0
    %v2110 = vadd.f32 0.0, %v2109
    %v2111 = vpop.f32.mrf.mxu0
    %v2112 = vadd.f32 0.0, %v2111
    %2113 = vmatmul.bf16.gmra.mxu0 %v2016
    %v2114 = vpop.f32.mrf.mxu0
    %v2115 = vadd.f32 0.0, %v2114
    %v2116 = vpop.f32.mrf.mxu0
    %v2117 = vadd.f32 0.0, %v2116
    %2118 = vmatmul.bf16.gmra.mxu0 %v2019
    %v2119 = vpop.f32.mrf.mxu0
    %v2120 = vadd.f32 0.0, %v2119
    %v2121 = vpop.f32.mrf.mxu0
    %v2122 = vadd.f32 0.0, %v2121
    %2123 = vmatmul.bf16.gmra.mxu0 %v2022
    %v2124 = vpop.f32.mrf.mxu0
    %v2125 = vadd.f32 0.0, %v2124
    %v2126 = vpop.f32.mrf.mxu0
    %v2127 = vadd.f32 0.0, %v2126
    %2128 = vmatmul.bf16.gmra.mxu0 %v2025
    %v2129 = vpop.f32.mrf.mxu0
    %v2130 = vadd.f32 0.0, %v2129
    %v2131 = vpop.f32.mrf.mxu0
    %v2132 = vadd.f32 0.0, %v2131
    %2133 = vmatmul.bf16.gmra.mxu0 %v2028
    %v2134 = vpop.f32.mrf.mxu0
    %v2135 = vadd.f32 0.0, %v2134
    %v2136 = vpop.f32.mrf.mxu0
    %v2137 = vadd.f32 0.0, %v2136
    %2138 = vmatmul.bf16.gmra.mxu0 %v2031
    %v2139 = vpop.f32.mrf.mxu0
    %v2140 = vadd.f32 0.0, %v2139
    %v2141 = vpop.f32.mrf.mxu0
    %v2142 = vadd.f32 0.0, %v2141
    %2143 = vmatmul.bf16.gmra.mxu0 %v2034
    %v2144 = vpop.f32.mrf.mxu0
    %v2145 = vadd.f32 0.0, %v2144
    %v2146 = vpop.f32.mrf.mxu0
    %v2147 = vadd.f32 0.0, %v2146
    %2148 = vmatmul.bf16.gmra.mxu0 %v2037
    %v2149 = vpop.f32.mrf.mxu0
    %v2150 = vadd.f32 0.0, %v2149
    %v2151 = vpop.f32.mrf.mxu0
    %v2152 = vadd.f32 0.0, %v2151
    %2153 = vmatmul.bf16.gmra.mxu0 %v2040
    %v2154 = vpop.f32.mrf.mxu0
    %v2155 = vadd.f32 0.0, %v2154
    %v2156 = vpop.f32.mrf.mxu0
    %v2157 = vadd.f32 0.0, %v2156
    %2158 = vmatmul.bf16.gmra.mxu0 %v2043
    %v2159 = vpop.f32.mrf.mxu0
    %v2160 = vadd.f32 0.0, %v2159
    %v2161 = vpop.f32.mrf.mxu0
    %v2162 = vadd.f32 0.0, %v2161
    %2163 = vmatmul.bf16.gmra.mxu0 %v2046
    %v2164 = vpop.f32.mrf.mxu0
    %v2165 = vadd.f32 0.0, %v2164
    %v2166 = vpop.f32.mrf.mxu0
    %v2167 = vadd.f32 0.0, %v2166
    %2168 = vmatmul.bf16.gmra.mxu0 %v2049
    %v2169 = vpop.f32.mrf.mxu0
    %v2170 = vadd.f32 0.0, %v2169
    %v2171 = vpop.f32.mrf.mxu0
    %v2172 = vadd.f32 0.0, %v2171
    %2173 = vmatmul.bf16.gmra.mxu0 %v2052
    %v2174 = vpop.f32.mrf.mxu0
    %v2175 = vadd.f32 0.0, %v2174
    %v2176 = vpop.f32.mrf.mxu0
    %v2177 = vadd.f32 0.0, %v2176
    %2178 = vmatmul.bf16.gmra.mxu0 %v2055
    %v2179 = vpop.f32.mrf.mxu0
    %v2180 = vadd.f32 0.0, %v2179
    %v2181 = vpop.f32.mrf.mxu0
    %v2182 = vadd.f32 0.0, %v2181
    %2183 = vmatmul.bf16.gmra.mxu0 %v2058
    %v2184 = vpop.f32.mrf.mxu0
    %v2185 = vadd.f32 0.0, %v2184
    %v2186 = vpop.f32.mrf.mxu0
    %v2187 = vadd.f32 0.0, %v2186
    %2188 = vdwg.mxu0
    %v2189 = vpack.c.bf16 %v2072, %v2070
    %v2190 = vpack.c.bf16 %v2077, %v2075
    %v2191 = vpack.c.bf16 %v2082, %v2080
    %v2192 = vpack.c.bf16 %v2087, %v2085
    %v2193 = vpack.c.bf16 %v2092, %v2090
    %v2194 = vpack.c.bf16 %v2097, %v2095
    %v2195 = vpack.c.bf16 %v2102, %v2100
    %v2196 = vpack.c.bf16 %v2107, %v2105
    %v2197 = vpack.c.bf16 %v2112, %v2110
    %v2198 = vpack.c.bf16 %v2117, %v2115
    %v2199 = vpack.c.bf16 %v2122, %v2120
    %v2200 = vpack.c.bf16 %v2127, %v2125
    %v2201 = vpack.c.bf16 %v2132, %v2130
    %v2202 = vpack.c.bf16 %v2137, %v2135
    %v2203 = vpack.c.bf16 %v2142, %v2140
    %v2204 = vpack.c.bf16 %v2147, %v2145
    %v2205 = vpack.c.bf16 %v2152, %v2150
    %v2206 = vpack.c.bf16 %v2157, %v2155
    %v2207 = vpack.c.bf16 %v2162, %v2160
    %v2208 = vpack.c.bf16 %v2167, %v2165
    %v2209 = vpack.c.bf16 %v2172, %v2170
    %v2210 = vpack.c.bf16 %v2177, %v2175
    %v2211 = vpack.c.bf16 %v2182, %v2180
    %v2212 = vpack.c.bf16 %v2187, %v2185
    %v2214 = vperm.slane %v160, 0
    %2216 = vmatpush.bf16.msra.mxu0 %v2196
    %2217 = vmatpush.bf16.msra.mxu0 %v2195
    %2218 = vmatpush.bf16.msra.mxu0 %v2194
    %2219 = vmatpush.bf16.msra.mxu0 %v2193
    %2220 = vmatpush.bf16.msra.mxu0 %v2192
    %2221 = vmatpush.bf16.msra.mxu0 %v2191
    %2222 = vmatpush.bf16.msra.mxu0 %v2190
    %2223 = vmatpush.bf16.msra.mxu0 %v2189
    %2224 = vmatmul.bf16.gmra.mxu0 %v1360
    %v2225 = vpop.f32.mrf.mxu0
    %v2226 = vadd.f32 %v2214, %v2225
    %v2227 = vpop.f32.mrf.mxu0
    %v2228 = vadd.f32 %v2214, %v2227
    %2229 = vmatmul.bf16.gmra.mxu0 %v1363
    %v2230 = vpop.f32.mrf.mxu0
    %v2231 = vadd.f32 %v2214, %v2230
    %v2232 = vpop.f32.mrf.mxu0
    %v2233 = vadd.f32 %v2214, %v2232
    %2234 = vmatmul.bf16.gmra.mxu0 %v1366
    %v2235 = vpop.f32.mrf.mxu0
    %v2236 = vadd.f32 %v2214, %v2235
    %v2237 = vpop.f32.mrf.mxu0
    %v2238 = vadd.f32 %v2214, %v2237
    %2239 = vmatmul.bf16.gmra.mxu0 %v1369
    %v2240 = vpop.f32.mrf.mxu0
    %v2241 = vadd.f32 %v2214, %v2240
    %v2242 = vpop.f32.mrf.mxu0
    %v2243 = vadd.f32 %v2214, %v2242
    %2244 = vmatmul.bf16.gmra.mxu0 %v1372
    %v2245 = vpop.f32.mrf.mxu0
    %v2246 = vadd.f32 %v2214, %v2245
    %v2247 = vpop.f32.mrf.mxu0
    %v2248 = vadd.f32 %v2214, %v2247
    %2249 = vmatmul.bf16.gmra.mxu0 %v1375
    %v2250 = vpop.f32.mrf.mxu0
    %v2251 = vadd.f32 %v2214, %v2250
    %v2252 = vpop.f32.mrf.mxu0
    %v2253 = vadd.f32 %v2214, %v2252
    %2254 = vmatmul.bf16.gmra.mxu0 %v1378
    %v2255 = vpop.f32.mrf.mxu0
    %v2256 = vadd.f32 %v2214, %v2255
    %v2257 = vpop.f32.mrf.mxu0
    %v2258 = vadd.f32 %v2214, %v2257
    %2259 = vmatmul.bf16.gmra.mxu0 %v1381
    %v2260 = vpop.f32.mrf.mxu0
    %v2261 = vadd.f32 %v2214, %v2260
    %v2262 = vpop.f32.mrf.mxu0
    %v2263 = vadd.f32 %v2214, %v2262
    %2264 = vmatmul.bf16.gmra.mxu0 %v1384
    %v2265 = vpop.f32.mrf.mxu0
    %v2266 = vadd.f32 %v2214, %v2265
    %v2267 = vpop.f32.mrf.mxu0
    %v2268 = vadd.f32 %v2214, %v2267
    %2269 = vmatmul.bf16.gmra.mxu0 %v1387
    %v2270 = vpop.f32.mrf.mxu0
    %v2271 = vadd.f32 %v2214, %v2270
    %v2272 = vpop.f32.mrf.mxu0
    %v2273 = vadd.f32 %v2214, %v2272
    %2274 = vmatmul.bf16.gmra.mxu0 %v1390
    %v2275 = vpop.f32.mrf.mxu0
    %v2276 = vadd.f32 %v2214, %v2275
    %v2277 = vpop.f32.mrf.mxu0
    %v2278 = vadd.f32 %v2214, %v2277
    %2279 = vmatmul.bf16.gmra.mxu0 %v1393
    %v2280 = vpop.f32.mrf.mxu0
    %v2281 = vadd.f32 %v2214, %v2280
    %v2282 = vpop.f32.mrf.mxu0
    %v2283 = vadd.f32 %v2214, %v2282
    %2284 = vmatmul.bf16.gmra.mxu0 %v1396
    %v2285 = vpop.f32.mrf.mxu0
    %v2286 = vadd.f32 %v2214, %v2285
    %v2287 = vpop.f32.mrf.mxu0
    %v2288 = vadd.f32 %v2214, %v2287
    %2289 = vmatmul.bf16.gmra.mxu0 %v1399
    %v2290 = vpop.f32.mrf.mxu0
    %v2291 = vadd.f32 %v2214, %v2290
    %v2292 = vpop.f32.mrf.mxu0
    %v2293 = vadd.f32 %v2214, %v2292
    %2294 = vmatmul.bf16.gmra.mxu0 %v1402
    %v2295 = vpop.f32.mrf.mxu0
    %v2296 = vadd.f32 %v2214, %v2295
    %v2297 = vpop.f32.mrf.mxu0
    %v2298 = vadd.f32 %v2214, %v2297
    %2299 = vmatmul.bf16.gmra.mxu0 %v1405
    %v2300 = vpop.f32.mrf.mxu0
    %v2301 = vadd.f32 %v2214, %v2300
    %v2302 = vpop.f32.mrf.mxu0
    %v2303 = vadd.f32 %v2214, %v2302
    %2304 = vmatmul.bf16.gmra.mxu0 %v1408
    %v2305 = vpop.f32.mrf.mxu0
    %v2306 = vadd.f32 %v2214, %v2305
    %v2307 = vpop.f32.mrf.mxu0
    %v2308 = vadd.f32 %v2214, %v2307
    %2309 = vmatmul.bf16.gmra.mxu0 %v1411
    %v2310 = vpop.f32.mrf.mxu0
    %v2311 = vadd.f32 %v2214, %v2310
    %v2312 = vpop.f32.mrf.mxu0
    %v2313 = vadd.f32 %v2214, %v2312
    %2314 = vmatmul.bf16.gmra.mxu0 %v1414
    %v2315 = vpop.f32.mrf.mxu0
    %v2316 = vadd.f32 %v2214, %v2315
    %v2317 = vpop.f32.mrf.mxu0
    %v2318 = vadd.f32 %v2214, %v2317
    %2319 = vmatmul.bf16.gmra.mxu0 %v1417
    %v2320 = vpop.f32.mrf.mxu0
    %v2321 = vadd.f32 %v2214, %v2320
    %v2322 = vpop.f32.mrf.mxu0
    %v2323 = vadd.f32 %v2214, %v2322
    %2324 = vmatmul.bf16.gmra.mxu0 %v1420
    %v2325 = vpop.f32.mrf.mxu0
    %v2326 = vadd.f32 %v2214, %v2325
    %v2327 = vpop.f32.mrf.mxu0
    %v2328 = vadd.f32 %v2214, %v2327
    %2329 = vmatmul.bf16.gmra.mxu0 %v1423
    %v2330 = vpop.f32.mrf.mxu0
    %v2331 = vadd.f32 %v2214, %v2330
    %v2332 = vpop.f32.mrf.mxu0
    %v2333 = vadd.f32 %v2214, %v2332
    %2334 = vmatmul.bf16.gmra.mxu0 %v1426
    %v2335 = vpop.f32.mrf.mxu0
    %v2336 = vadd.f32 %v2214, %v2335
    %v2337 = vpop.f32.mrf.mxu0
    %v2338 = vadd.f32 %v2214, %v2337
    %2339 = vmatmul.bf16.gmra.mxu0 %v1429
    %v2340 = vpop.f32.mrf.mxu0
    %v2341 = vadd.f32 %v2214, %v2340
    %v2342 = vpop.f32.mrf.mxu0
    %v2343 = vadd.f32 %v2214, %v2342
    %2344 = vdwg.mxu0
    %2345 = vmatpush.bf16.msra.mxu0 %v2204
    %2346 = vmatpush.bf16.msra.mxu0 %v2203
    %2347 = vmatpush.bf16.msra.mxu0 %v2202
    %2348 = vmatpush.bf16.msra.mxu0 %v2201
    %2349 = vmatpush.bf16.msra.mxu0 %v2200
    %2350 = vmatpush.bf16.msra.mxu0 %v2199
    %2351 = vmatpush.bf16.msra.mxu0 %v2198
    %2352 = vmatpush.bf16.msra.mxu0 %v2197
    %2353 = vmatmul.bf16.gmra.mxu0 %v1361
    %v2354 = vpop.f32.mrf.mxu0
    %v2355 = vadd.f32 %v2226, %v2354
    %v2356 = vpop.f32.mrf.mxu0
    %v2357 = vadd.f32 %v2228, %v2356
    %2358 = vmatmul.bf16.gmra.mxu0 %v1364
    %v2359 = vpop.f32.mrf.mxu0
    %v2360 = vadd.f32 %v2231, %v2359
    %v2361 = vpop.f32.mrf.mxu0
    %v2362 = vadd.f32 %v2233, %v2361
    %2363 = vmatmul.bf16.gmra.mxu0 %v1367
    %v2364 = vpop.f32.mrf.mxu0
    %v2365 = vadd.f32 %v2236, %v2364
    %v2366 = vpop.f32.mrf.mxu0
    %v2367 = vadd.f32 %v2238, %v2366
    %2368 = vmatmul.bf16.gmra.mxu0 %v1370
    %v2369 = vpop.f32.mrf.mxu0
    %v2370 = vadd.f32 %v2241, %v2369
    %v2371 = vpop.f32.mrf.mxu0
    %v2372 = vadd.f32 %v2243, %v2371
    %2373 = vmatmul.bf16.gmra.mxu0 %v1373
    %v2374 = vpop.f32.mrf.mxu0
    %v2375 = vadd.f32 %v2246, %v2374
    %v2376 = vpop.f32.mrf.mxu0
    %v2377 = vadd.f32 %v2248, %v2376
    %2378 = vmatmul.bf16.gmra.mxu0 %v1376
    %v2379 = vpop.f32.mrf.mxu0
    %v2380 = vadd.f32 %v2251, %v2379
    %v2381 = vpop.f32.mrf.mxu0
    %v2382 = vadd.f32 %v2253, %v2381
    %2383 = vmatmul.bf16.gmra.mxu0 %v1379
    %v2384 = vpop.f32.mrf.mxu0
    %v2385 = vadd.f32 %v2256, %v2384
    %v2386 = vpop.f32.mrf.mxu0
    %v2387 = vadd.f32 %v2258, %v2386
    %2388 = vmatmul.bf16.gmra.mxu0 %v1382
    %v2389 = vpop.f32.mrf.mxu0
    %v2390 = vadd.f32 %v2261, %v2389
    %v2391 = vpop.f32.mrf.mxu0
    %v2392 = vadd.f32 %v2263, %v2391
    %2393 = vmatmul.bf16.gmra.mxu0 %v1385
    %v2394 = vpop.f32.mrf.mxu0
    %v2395 = vadd.f32 %v2266, %v2394
    %v2396 = vpop.f32.mrf.mxu0
    %v2397 = vadd.f32 %v2268, %v2396
    %2398 = vmatmul.bf16.gmra.mxu0 %v1388
    %v2399 = vpop.f32.mrf.mxu0
    %v2400 = vadd.f32 %v2271, %v2399
    %v2401 = vpop.f32.mrf.mxu0
    %v2402 = vadd.f32 %v2273, %v2401
    %2403 = vmatmul.bf16.gmra.mxu0 %v1391
    %v2404 = vpop.f32.mrf.mxu0
    %v2405 = vadd.f32 %v2276, %v2404
    %v2406 = vpop.f32.mrf.mxu0
    %v2407 = vadd.f32 %v2278, %v2406
    %2408 = vmatmul.bf16.gmra.mxu0 %v1394
    %v2409 = vpop.f32.mrf.mxu0
    %v2410 = vadd.f32 %v2281, %v2409
    %v2411 = vpop.f32.mrf.mxu0
    %v2412 = vadd.f32 %v2283, %v2411
    %2413 = vmatmul.bf16.gmra.mxu0 %v1397
    %v2414 = vpop.f32.mrf.mxu0
    %v2415 = vadd.f32 %v2286, %v2414
    %v2416 = vpop.f32.mrf.mxu0
    %v2417 = vadd.f32 %v2288, %v2416
    %2418 = vmatmul.bf16.gmra.mxu0 %v1400
    %v2419 = vpop.f32.mrf.mxu0
    %v2420 = vadd.f32 %v2291, %v2419
    %v2421 = vpop.f32.mrf.mxu0
    %v2422 = vadd.f32 %v2293, %v2421
    %2423 = vmatmul.bf16.gmra.mxu0 %v1403
    %v2424 = vpop.f32.mrf.mxu0
    %v2425 = vadd.f32 %v2296, %v2424
    %v2426 = vpop.f32.mrf.mxu0
    %v2427 = vadd.f32 %v2298, %v2426
    %2428 = vmatmul.bf16.gmra.mxu0 %v1406
    %v2429 = vpop.f32.mrf.mxu0
    %v2430 = vadd.f32 %v2301, %v2429
    %v2431 = vpop.f32.mrf.mxu0
    %v2432 = vadd.f32 %v2303, %v2431
    %2433 = vmatmul.bf16.gmra.mxu0 %v1409
    %v2434 = vpop.f32.mrf.mxu0
    %v2435 = vadd.f32 %v2306, %v2434
    %v2436 = vpop.f32.mrf.mxu0
    %v2437 = vadd.f32 %v2308, %v2436
    %2438 = vmatmul.bf16.gmra.mxu0 %v1412
    %v2439 = vpop.f32.mrf.mxu0
    %v2440 = vadd.f32 %v2311, %v2439
    %v2441 = vpop.f32.mrf.mxu0
    %v2442 = vadd.f32 %v2313, %v2441
    %2443 = vmatmul.bf16.gmra.mxu0 %v1415
    %v2444 = vpop.f32.mrf.mxu0
    %v2445 = vadd.f32 %v2316, %v2444
    %v2446 = vpop.f32.mrf.mxu0
    %v2447 = vadd.f32 %v2318, %v2446
    %2448 = vmatmul.bf16.gmra.mxu0 %v1418
    %v2449 = vpop.f32.mrf.mxu0
    %v2450 = vadd.f32 %v2321, %v2449
    %v2451 = vpop.f32.mrf.mxu0
    %v2452 = vadd.f32 %v2323, %v2451
    %2453 = vmatmul.bf16.gmra.mxu0 %v1421
    %v2454 = vpop.f32.mrf.mxu0
    %v2455 = vadd.f32 %v2326, %v2454
    %v2456 = vpop.f32.mrf.mxu0
    %v2457 = vadd.f32 %v2328, %v2456
    %2458 = vmatmul.bf16.gmra.mxu0 %v1424
    %v2459 = vpop.f32.mrf.mxu0
    %v2460 = vadd.f32 %v2331, %v2459
    %v2461 = vpop.f32.mrf.mxu0
    %v2462 = vadd.f32 %v2333, %v2461
    %2463 = vmatmul.bf16.gmra.mxu0 %v1427
    %v2464 = vpop.f32.mrf.mxu0
    %v2465 = vadd.f32 %v2336, %v2464
    %v2466 = vpop.f32.mrf.mxu0
    %v2467 = vadd.f32 %v2338, %v2466
    %2468 = vmatmul.bf16.gmra.mxu0 %v1430
    %v2469 = vpop.f32.mrf.mxu0
    %v2470 = vadd.f32 %v2341, %v2469
    %v2471 = vpop.f32.mrf.mxu0
    %v2472 = vadd.f32 %v2343, %v2471
    %2473 = vdwg.mxu0
    %2474 = vmatpush.bf16.msra.mxu0 %v2212
    %2475 = vmatpush.bf16.msra.mxu0 %v2211
    %2476 = vmatpush.bf16.msra.mxu0 %v2210
    %2477 = vmatpush.bf16.msra.mxu0 %v2209
    %2478 = vmatpush.bf16.msra.mxu0 %v2208
    %2479 = vmatpush.bf16.msra.mxu0 %v2207
    %2480 = vmatpush.bf16.msra.mxu0 %v2206
    %2481 = vmatpush.bf16.msra.mxu0 %v2205
    %2482 = vmatmul.bf16.gmra.mxu0 %v1362
    %v2483 = vpop.f32.mrf.mxu0
    %v2484 = vadd.f32 %v2355, %v2483
    %v2485 = vpop.f32.mrf.mxu0
    %v2486 = vadd.f32 %v2357, %v2485
    %2487 = vmatmul.bf16.gmra.mxu0 %v1365
    %v2488 = vpop.f32.mrf.mxu0
    %v2489 = vadd.f32 %v2360, %v2488
    %v2490 = vpop.f32.mrf.mxu0
    %v2491 = vadd.f32 %v2362, %v2490
    %2492 = vmatmul.bf16.gmra.mxu0 %v1368
    %v2493 = vpop.f32.mrf.mxu0
    %v2494 = vadd.f32 %v2365, %v2493
    %v2495 = vpop.f32.mrf.mxu0
    %v2496 = vadd.f32 %v2367, %v2495
    %2497 = vmatmul.bf16.gmra.mxu0 %v1371
    %v2498 = vpop.f32.mrf.mxu0
    %v2499 = vadd.f32 %v2370, %v2498
    %v2500 = vpop.f32.mrf.mxu0
    %v2501 = vadd.f32 %v2372, %v2500
    %2502 = vmatmul.bf16.gmra.mxu0 %v1374
    %v2503 = vpop.f32.mrf.mxu0
    %v2504 = vadd.f32 %v2375, %v2503
    %v2505 = vpop.f32.mrf.mxu0
    %v2506 = vadd.f32 %v2377, %v2505
    %2507 = vmatmul.bf16.gmra.mxu0 %v1377
    %v2508 = vpop.f32.mrf.mxu0
    %v2509 = vadd.f32 %v2380, %v2508
    %v2510 = vpop.f32.mrf.mxu0
    %v2511 = vadd.f32 %v2382, %v2510
    %2512 = vmatmul.bf16.gmra.mxu0 %v1380
    %v2513 = vpop.f32.mrf.mxu0
    %v2514 = vadd.f32 %v2385, %v2513
    %v2515 = vpop.f32.mrf.mxu0
    %v2516 = vadd.f32 %v2387, %v2515
    %2517 = vmatmul.bf16.gmra.mxu0 %v1383
    %v2518 = vpop.f32.mrf.mxu0
    %v2519 = vadd.f32 %v2390, %v2518
    %v2520 = vpop.f32.mrf.mxu0
    %v2521 = vadd.f32 %v2392, %v2520
    %2522 = vmatmul.bf16.gmra.mxu0 %v1386
    %v2523 = vpop.f32.mrf.mxu0
    %v2524 = vadd.f32 %v2395, %v2523
    %v2525 = vpop.f32.mrf.mxu0
    %v2526 = vadd.f32 %v2397, %v2525
    %2527 = vmatmul.bf16.gmra.mxu0 %v1389
    %v2528 = vpop.f32.mrf.mxu0
    %v2529 = vadd.f32 %v2400, %v2528
    %v2530 = vpop.f32.mrf.mxu0
    %v2531 = vadd.f32 %v2402, %v2530
    %2532 = vmatmul.bf16.gmra.mxu0 %v1392
    %v2533 = vpop.f32.mrf.mxu0
    %v2534 = vadd.f32 %v2405, %v2533
    %v2535 = vpop.f32.mrf.mxu0
    %v2536 = vadd.f32 %v2407, %v2535
    %2537 = vmatmul.bf16.gmra.mxu0 %v1395
    %v2538 = vpop.f32.mrf.mxu0
    %v2539 = vadd.f32 %v2410, %v2538
    %v2540 = vpop.f32.mrf.mxu0
    %v2541 = vadd.f32 %v2412, %v2540
    %2542 = vmatmul.bf16.gmra.mxu0 %v1398
    %v2543 = vpop.f32.mrf.mxu0
    %v2544 = vadd.f32 %v2415, %v2543
    %v2545 = vpop.f32.mrf.mxu0
    %v2546 = vadd.f32 %v2417, %v2545
    %2547 = vmatmul.bf16.gmra.mxu0 %v1401
    %v2548 = vpop.f32.mrf.mxu0
    %v2549 = vadd.f32 %v2420, %v2548
    %v2550 = vpop.f32.mrf.mxu0
    %v2551 = vadd.f32 %v2422, %v2550
    %2552 = vmatmul.bf16.gmra.mxu0 %v1404
    %v2553 = vpop.f32.mrf.mxu0
    %v2554 = vadd.f32 %v2425, %v2553
    %v2555 = vpop.f32.mrf.mxu0
    %v2556 = vadd.f32 %v2427, %v2555
    %2557 = vmatmul.bf16.gmra.mxu0 %v1407
    %v2558 = vpop.f32.mrf.mxu0
    %v2559 = vadd.f32 %v2430, %v2558
    %v2560 = vpop.f32.mrf.mxu0
    %v2561 = vadd.f32 %v2432, %v2560
    %2562 = vmatmul.bf16.gmra.mxu0 %v1410
    %v2563 = vpop.f32.mrf.mxu0
    %v2564 = vadd.f32 %v2435, %v2563
    %v2565 = vpop.f32.mrf.mxu0
    %v2566 = vadd.f32 %v2437, %v2565
    %2567 = vmatmul.bf16.gmra.mxu0 %v1413
    %v2568 = vpop.f32.mrf.mxu0
    %v2569 = vadd.f32 %v2440, %v2568
    %v2570 = vpop.f32.mrf.mxu0
    %v2571 = vadd.f32 %v2442, %v2570
    %2572 = vmatmul.bf16.gmra.mxu0 %v1416
    %v2573 = vpop.f32.mrf.mxu0
    %v2574 = vadd.f32 %v2445, %v2573
    %v2575 = vpop.f32.mrf.mxu0
    %v2576 = vadd.f32 %v2447, %v2575
    %2577 = vmatmul.bf16.gmra.mxu0 %v1419
    %v2578 = vpop.f32.mrf.mxu0
    %v2579 = vadd.f32 %v2450, %v2578
    %v2580 = vpop.f32.mrf.mxu0
    %v2581 = vadd.f32 %v2452, %v2580
    %2582 = vmatmul.bf16.gmra.mxu0 %v1422
    %v2583 = vpop.f32.mrf.mxu0
    %v2584 = vadd.f32 %v2455, %v2583
    %v2585 = vpop.f32.mrf.mxu0
    %v2586 = vadd.f32 %v2457, %v2585
    %2587 = vmatmul.bf16.gmra.mxu0 %v1425
    %v2588 = vpop.f32.mrf.mxu0
    %v2589 = vadd.f32 %v2460, %v2588
    %v2590 = vpop.f32.mrf.mxu0
    %v2591 = vadd.f32 %v2462, %v2590
    %2592 = vmatmul.bf16.gmra.mxu0 %v1428
    %v2593 = vpop.f32.mrf.mxu0
    %v2594 = vadd.f32 %v2465, %v2593
    %v2595 = vpop.f32.mrf.mxu0
    %v2596 = vadd.f32 %v2467, %v2595
    %2597 = vmatmul.bf16.gmra.mxu0 %v1431
    %v2598 = vpop.f32.mrf.mxu0
    %v2599 = vadd.f32 %v2470, %v2598
    %v2600 = vpop.f32.mrf.mxu0
    %v2601 = vadd.f32 %v2472, %v2600
    %2602 = vdwg.mxu0
    %v2603 = vmax.f32 %v2484, 0.0
    %v2604 = vmax.f32 %v2486, 0.0
    %v2605 = vmax.f32 %v2489, 0.0
    %v2606 = vmax.f32 %v2491, 0.0
    %v2607 = vmax.f32 %v2494, 0.0
    %v2608 = vmax.f32 %v2496, 0.0
    %v2609 = vmax.f32 %v2499, 0.0
    %v2610 = vmax.f32 %v2501, 0.0
    %v2611 = vmax.f32 %v2504, 0.0
    %v2612 = vmax.f32 %v2506, 0.0
    %v2613 = vmax.f32 %v2509, 0.0
    %v2614 = vmax.f32 %v2511, 0.0
    %v2615 = vmax.f32 %v2514, 0.0
    %v2616 = vmax.f32 %v2516, 0.0
    %v2617 = vmax.f32 %v2519, 0.0
    %v2618 = vmax.f32 %v2521, 0.0
    %v2619 = vmax.f32 %v2524, 0.0
    %v2620 = vmax.f32 %v2526, 0.0
    %v2621 = vmax.f32 %v2529, 0.0
    %v2622 = vmax.f32 %v2531, 0.0
    %v2623 = vmax.f32 %v2534, 0.0
    %v2624 = vmax.f32 %v2536, 0.0
    %v2625 = vmax.f32 %v2539, 0.0
    %v2626 = vmax.f32 %v2541, 0.0
    %v2627 = vmax.f32 %v2544, 0.0
    %v2628 = vmax.f32 %v2546, 0.0
    %v2629 = vmax.f32 %v2549, 0.0
    %v2630 = vmax.f32 %v2551, 0.0
    %v2631 = vmax.f32 %v2554, 0.0
    %v2632 = vmax.f32 %v2556, 0.0
    %v2633 = vmax.f32 %v2559, 0.0
    %v2634 = vmax.f32 %v2561, 0.0
    %v2635 = vmax.f32 %v2564, 0.0
    %v2636 = vmax.f32 %v2566, 0.0
    %v2637 = vmax.f32 %v2569, 0.0
    %v2638 = vmax.f32 %v2571, 0.0
    %v2639 = vmax.f32 %v2574, 0.0
    %v2640 = vmax.f32 %v2576, 0.0
    %v2641 = vmax.f32 %v2579, 0.0
    %v2642 = vmax.f32 %v2581, 0.0
    %v2643 = vmax.f32 %v2584, 0.0
    %v2644 = vmax.f32 %v2586, 0.0
    %v2645 = vmax.f32 %v2589, 0.0
    %v2646 = vmax.f32 %v2591, 0.0
    %v2647 = vmax.f32 %v2594, 0.0
    %v2648 = vmax.f32 %v2596, 0.0
    %v2649 = vmax.f32 %v2599, 0.0
    %v2650 = vmax.f32 %v2601, 0.0
    %v2651 = vpack.c.bf16 %v2604, %v2603
    %v2652 = vpack.c.bf16 %v2606, %v2605
    %v2653 = vpack.c.bf16 %v2608, %v2607
    %v2654 = vpack.c.bf16 %v2610, %v2609
    %v2655 = vpack.c.bf16 %v2612, %v2611
    %v2656 = vpack.c.bf16 %v2614, %v2613
    %v2657 = vpack.c.bf16 %v2616, %v2615
    %v2658 = vpack.c.bf16 %v2618, %v2617
    %v2659 = vpack.c.bf16 %v2620, %v2619
    %v2660 = vpack.c.bf16 %v2622, %v2621
    %v2661 = vpack.c.bf16 %v2624, %v2623
    %v2662 = vpack.c.bf16 %v2626, %v2625
    %v2663 = vpack.c.bf16 %v2628, %v2627
    %v2664 = vpack.c.bf16 %v2630, %v2629
    %v2665 = vpack.c.bf16 %v2632, %v2631
    %v2666 = vpack.c.bf16 %v2634, %v2633
    %v2667 = vpack.c.bf16 %v2636, %v2635
    %v2668 = vpack.c.bf16 %v2638, %v2637
    %v2669 = vpack.c.bf16 %v2640, %v2639
    %v2670 = vpack.c.bf16 %v2642, %v2641
    %v2671 = vpack.c.bf16 %v2644, %v2643
    %v2672 = vpack.c.bf16 %v2646, %v2645
    %v2673 = vpack.c.bf16 %v2648, %v2647
    %v2674 = vpack.c.bf16 %v2650, %v2649
    %v2679 = vunpack.c.l.b16 %v146
    %v2680 = vunpack.c.h.b16 %v146
    %v2681 = vunpack.c.l.b16 %v147
    %v2682 = vunpack.c.l.b16 %v148
    %v2683 = vunpack.c.h.b16 %v148
    %v2684 = vunpack.c.l.b16 %v149
    %v2685 = vpack.c.b16 %v2682, %v2679
    %v2686 = vpack.c.b16 %v2683, %v2680
    %v2687 = vpack.c.b16 %v2684, %v2681
    %2691 = vmatpush.bf16.msra.mxu0 %v2658
    %2692 = vmatpush.bf16.msra.mxu0 %v2657
    %2693 = vmatpush.bf16.msra.mxu0 %v2656
    %2694 = vmatpush.bf16.msra.mxu0 %v2655
    %2695 = vmatpush.bf16.msra.mxu0 %v2654
    %2696 = vmatpush.bf16.msra.mxu0 %v2653
    %2697 = vmatpush.bf16.msra.mxu0 %v2652
    %2698 = vmatpush.bf16.msra.mxu0 %v2651
    %2699 = vmatmul.bf16.gmra.mxu0 %v2685
    %v2700 = vpop.f32.mrf.mxu0
    %v2701 = vadd.f32 0.0, %v2700
    %v2702 = vpop.f32.mrf.mxu0
    %v2703 = vadd.f32 0.0, %v2702
    %2704 = vdwg.mxu0
    %2705 = vmatpush.bf16.msra.mxu0 %v2666
    %2706 = vmatpush.bf16.msra.mxu0 %v2665
    %2707 = vmatpush.bf16.msra.mxu0 %v2664
    %2708 = vmatpush.bf16.msra.mxu0 %v2663
    %2709 = vmatpush.bf16.msra.mxu0 %v2662
    %2710 = vmatpush.bf16.msra.mxu0 %v2661
    %2711 = vmatpush.bf16.msra.mxu0 %v2660
    %2712 = vmatpush.bf16.msra.mxu0 %v2659
    %2713 = vmatmul.bf16.gmra.mxu0 %v2686
    %v2714 = vpop.f32.mrf.mxu0
    %v2715 = vadd.f32 %v2701, %v2714
    %v2716 = vpop.f32.mrf.mxu0
    %v2717 = vadd.f32 %v2703, %v2716
    %2718 = vdwg.mxu0
    %2719 = vmatpush.bf16.msra.mxu0 %v2674
    %2720 = vmatpush.bf16.msra.mxu0 %v2673
    %2721 = vmatpush.bf16.msra.mxu0 %v2672
    %2722 = vmatpush.bf16.msra.mxu0 %v2671
    %2723 = vmatpush.bf16.msra.mxu0 %v2670
    %2724 = vmatpush.bf16.msra.mxu0 %v2669
    %2725 = vmatpush.bf16.msra.mxu0 %v2668
    %2726 = vmatpush.bf16.msra.mxu0 %v2667
    %2727 = vmatmul.bf16.gmra.mxu0 %v2687
    %v2728 = vpop.f32.mrf.mxu0
    %v2729 = vadd.f32 %v2715, %v2728
    %v2730 = vpop.f32.mrf.mxu0
    %v2731 = vadd.f32 %v2717, %v2730
    %2732 = vdwg.mxu0
    %v2733 = vpack.c.bf16 %v2731, %v2729
    %v2735 = vperm.slane %v177, 0
    %v2753 = vunpack.c.l.b16 %v161
    %v2754 = vunpack.c.l.b16 %v162
    %v2755 = vunpack.c.l.b16 %v163
    %v2756 = vunpack.c.l.b16 %v164
    %v2757 = vunpack.c.l.b16 %v165
    %v2758 = vunpack.c.l.b16 %v166
    %v2759 = vunpack.c.l.b16 %v167
    %v2760 = vunpack.c.l.b16 %v168
    %v2761 = vunpack.c.l.b16 %v169
    %v2762 = vunpack.c.l.b16 %v170
    %v2763 = vunpack.c.l.b16 %v171
    %v2764 = vunpack.c.l.b16 %v172
    %v2765 = vunpack.c.l.b16 %v173
    %v2766 = vunpack.c.l.b16 %v174
    %v2767 = vunpack.c.l.b16 %v175
    %v2768 = vunpack.c.l.b16 %v176
    %v2769 = vpack.c.b16 %v2754, %v2753
    %v2770 = vpack.c.b16 %v2756, %v2755
    %v2771 = vpack.c.b16 %v2758, %v2757
    %v2772 = vpack.c.b16 %v2760, %v2759
    %v2773 = vpack.c.b16 %v2762, %v2761
    %v2774 = vpack.c.b16 %v2764, %v2763
    %v2775 = vpack.c.b16 %v2766, %v2765
    %v2776 = vpack.c.b16 %v2768, %v2767
    %2785 = vmatpush.bf16.msra.mxu0 %v2776
    %2786 = vmatpush.bf16.msra.mxu0 %v2775
    %2787 = vmatpush.bf16.msra.mxu0 %v2774
    %2788 = vmatpush.bf16.msra.mxu0 %v2773
    %2789 = vmatpush.bf16.msra.mxu0 %v2772
    %2790 = vmatpush.bf16.msra.mxu0 %v2771
    %2791 = vmatpush.bf16.msra.mxu0 %v2770
    %2792 = vmatpush.bf16.msra.mxu0 %v2769
    %2793 = vmatmul.bf16.gmra.mxu0 %v2733
    %v2794 = vpop.f32.mrf.mxu0
    %v2795 = vadd.f32 %v2735, %v2794
    %v2796 = vpop.f32.mrf.mxu0
    %v2797 = vadd.f32 %v2735, %v2796
    %2798 = vdwg.mxu0
    %2799 = vmax.xlane.f32.xlu0 %v2795
    %v2800 = vpop.xlane.xlu0 %2799
    %2801 = vmax.xlane.f32.xlu0 %v2797
    %v2802 = vpop.xlane.xlu0 %2801
    %v2803 = vsub.f32 %v2795, %v2800
    %v2804 = vsub.f32 %v2797, %v2802
    %v2805 = vmul.f32 %v2803, 1.442695
    %v2806 = vpow.pop %v2805
    %v2807 = vmul.f32 %v2804, 1.442695
    %v2808 = vpow.pop %v2807
    %2809 = vadd.xlane.f32.xlu0 %v2806
    %v2810 = vpop.xlane.xlu0 %2809
    %2811 = vadd.xlane.f32.xlu0 %v2808
    %v2812 = vpop.xlane.xlu0 %2811
    %v2813 = vlog2.pop %v2810
    %v2814 = vmul.f32 %v2813, 0.6931472
    %v2815 = vlog2.pop %v2812
    %v2816 = vmul.f32 %v2815, 0.6931472
    %v2817 = vsub.f32 %v2803, %v2814
    %v2818 = vsub.f32 %v2804, %v2816
    %2819 = vst [vmem:[#allocation5] sm:$0xff] %v2817
    %2820 = vst [vmem:[#allocation5 + $0x8] sm:$0xff] %v2818
    // Predicated region
    $region42: #{tpu_custom_call.1} parent=1 // pred_check
      _
    $region43: #{tpu_custom_call.1} parent=1 // pred_check_branch
      %2822 = sbr.rel (0) target = $region45
    $region44: #{tpu_custom_call.1} parent=1 // pred_region
      %2824 = vsyncadd [#allocation4], 0
      %s2825 = sshll.u32 [#allocation5], 4
      %s2826 = int_to_ptr.vmem [resolvable:$true] %s2825
      %s2827 = sshll.u32 %s9, 4
      %s2828 = int_to_ptr.hbm [resolvable:$true] %s2827
      %2833 = dma.vmem_to_hbm [thread:$0]  %s2826, 256, %s2828, [#allocation4], 128, 128, 8
    $region45: #{tpu_custom_call.1} parent=1 // pred_fallthru
      _
    // Predicated region
    $region46: #{tpu_custom_call.1} parent=1 // pred_check
      _
    $region47: #{tpu_custom_call.1} parent=1 // pred_check_branch
      %2835 = sbr.rel (0) target = $region49
    $region48: #{tpu_custom_call.1} parent=1 // pred_region
      %2837 = dma.done [#allocation4], 256
    $region49: #{tpu_custom_call.1} parent=1 // pred_fallthru
      _
    %2838 = vsyncpa [#allocation3], 1
    %2839 = vsyncpa [#allocation4], 1

</llo_original>
